<compile_context>
chip_gen: v5e
topology: v5e:2x2
jax: 0.10.0
libtpu: 0.0.40
codegen_flags: <defaults>
</compile_context>

<pallas_src>
import functools

import jax
import jax.numpy as jnp
import numpy as np
from jax.experimental import pallas as pl
from jax.experimental.pallas import tpu as pltpu

# ----------------------------- static config --------------------------------
DATA_SAMPLE_SIZE = 376   # hardcoded in the module
IN_CHANNELS = 62         # hardcoded in the module
PSD_SIZE = 74            # conv1d_psd output length  => psd input length = 76
PSD_IN_LEN = PSD_SIZE + 3 - 1
K = 32                   # params['K']
FC_HIDDEN = 64           # params['fc_hidden_size']
BATCH = 8


def compute_kernel_stride(input_size, output_size):
    """Exact replica of EEGClassifier.compute_kernel_stride."""
    for kernel_size in range(1, input_size + 1):
        for stride in range(1, input_size + 1):
            computed = (input_size - kernel_size + 1) // stride + 1
            if computed == output_size and (input_size - kernel_size) % stride == 0:
                return int(kernel_size), int(stride)
    return 3, 1


K2, S2 = compute_kernel_stride(DATA_SAMPLE_SIZE, K)
LINEAR_INPUT = (DATA_SAMPLE_SIZE - K2) // S2 + 1
# The fc1 weight split below assumes linear_input == K for this config.
assert LINEAR_INPUT == K, (LINEAR_INPUT, K)


# ------------------------------- kernel --------------------------------------
def eeg_kernel(fc2b_ref, eeg_ref, psd_ref, w1t_ref, wpsdt_ref,
               weeg_ref, wpsd_ref, fc1b_ref, fc2w_ref, out_ref):
    B = eeg_ref.shape[0]

    # Channel contraction for both conv branches: one batched matmul each,
    # z[b, k, s] = sum_c w[c, k] * x[b, c, s].   (B,3,62) @ (B,62,L) -> (B,3,L)
    w1t_b = jnp.broadcast_to(w1t_ref[...][None], (B, 3, IN_CHANNELS))
    z_eeg = jnp.einsum("bkc,bct->bkt", w1t_b, eeg_ref[...],
                       preferred_element_type=jnp.float32)       # (B, 3, 376)
    wpt_b = jnp.broadcast_to(wpsdt_ref[...][None], (B, 3, IN_CHANNELS))
    z_psd = jnp.einsum("bkc,bct->bkt", wpt_b, psd_ref[...],
                       preferred_element_type=jnp.float32)       # (B, 3, 76)

    # conv1 shifts + conv1d_2 (banded) + BatchNorm scale + fc1 are all folded
    # into the host-built per-tap weight slabs; biases live in fc1b_ref.
    h = jnp.broadcast_to(fc1b_ref[...], (B, FC_HIDDEN))          # (B, 64)
    for k in range(3):
        h = h + jnp.dot(z_eeg[:, k, :], weeg_ref[k],
                        preferred_element_type=jnp.float32)
        h = h + jnp.dot(z_psd[:, k, :], wpsd_ref[k],
                        preferred_element_type=jnp.float32)

    # TODO(synk): dropout is stochastic in train mode; eval-mode identity here.
    h = jnp.maximum(h, 0.0)                                      # relu

    logit = jnp.dot(h, fc2w_ref[...],
                    preferred_element_type=jnp.float32) + fc2b_ref[0]
    out_ref[...] = jax.nn.sigmoid(logit)


def eeg_classifier_forward(eeg, psd, params):
    """eeg: (B, 62, 376) f32, psd: (B, 62, 76) f32 -> (B, 1) f32."""
    B = eeg.shape[0]

    grid_spec = pltpu.PrefetchScalarGridSpec(
        num_scalar_prefetch=0,
        grid=(1,),
        in_specs=[
            pl.BlockSpec(memory_space=pltpu.MemorySpace.SMEM),          # fc2 bias (1,)
            pl.BlockSpec((B, IN_CHANNELS, DATA_SAMPLE_SIZE),
                         lambda i: (0, 0, 0)),                          # eeg
            pl.BlockSpec((B, IN_CHANNELS, PSD_IN_LEN),
                         lambda i: (0, 0, 0)),                          # psd
            pl.BlockSpec((3, IN_CHANNELS), lambda i: (0, 0)),           # w1^T
            pl.BlockSpec((3, IN_CHANNELS), lambda i: (0, 0)),           # wpsd^T
            pl.BlockSpec((3, DATA_SAMPLE_SIZE, FC_HIDDEN),
                         lambda i: (0, 0, 0)),                          # folded eeg->fc1
            pl.BlockSpec((3, PSD_IN_LEN, FC_HIDDEN),
                         lambda i: (0, 0, 0)),                          # folded psd->fc1
            pl.BlockSpec((1, FC_HIDDEN), lambda i: (0, 0)),             # effective fc1 bias
            pl.BlockSpec((FC_HIDDEN, 1), lambda i: (0, 0)),             # fc2 weight
        ],
        out_specs=pl.BlockSpec((B, 1), lambda i: (0, 0)),
    )

    return pl.pallas_call(
        eeg_kernel,
        out_shape=jax.ShapeDtypeStruct((B, 1), jnp.float32),
        grid_spec=grid_spec,
        compiler_params=pltpu.CompilerParams(
            dimension_semantics=("arbitrary",)),
    )(params["fc2b"], eeg, psd, params["w1t"], params["wpsdt"],
      params["weeg"], params["wpsd"], params["fc1b_eff"], params["fc2w"])


# ----------------------------- reference (plain JAX) -------------------------
def reference_forward(eeg, psd, raw):
    xpad = jnp.pad(eeg, ((0, 0), (0, 0), (1, 1)))
    y1 = raw["b1"]
    for k in range(3):
        y1 = y1 + jnp.einsum("bcl,c->bl",
                             xpad[:, :, k:k + DATA_SAMPLE_SIZE], raw["w1"][:, k])
    y2 = jnp.stack(
        [(y1[:, j * S2:j * S2 + K2] * raw["w2"][None, :]).sum(-1)
         for j in range(LINEAR_INPUT)], axis=1) + raw["b2"]
    y2 = y2 * raw["bn_scale"] + raw["bn_shift"]
    yp = raw["bpsd"]
    for k in range(3):
        yp = yp + jnp.einsum("bcl,c->bl",
                             psd[:, :, k:k + PSD_SIZE], raw["wpsd"][:, k])
    x = jnp.concatenate([y2, yp], axis=1)
    h = jax.nn.relu(x @ raw["fc1_w"] + raw["fc1_b"])
    return jax.nn.sigmoid(h @ raw["fc2_w"] + raw["fc2_b"])


# --------------------------------- main ---------------------------------------
if __name__ == "__main__":
    keys = jax.random.split(jax.random.PRNGKey(0), 10)

    # deterministic synthetic parameters (shapes from EEGClassifier.__init__)
    w1 = jax.random.normal(keys[0], (IN_CHANNELS, 3), jnp.float32) * 0.1
    b1 = 0.01
    w2 = jax.random.normal(keys[1], (K2,), jnp.float32) * 0.1
    b2 = -0.02
    wpsd = jax.random.normal(keys[2], (IN_CHANNELS, 3), jnp.float32) * 0.1
    bpsd = 0.03
    fc1_w = (jax.random.normal(keys[3], (LINEAR_INPUT + PSD_SIZE, FC_HIDDEN),
                               jnp.float32)
             * (1.0 / np.sqrt(LINEAR_INPUT + PSD_SIZE)))
    fc1_b = jax.random.normal(keys[4], (FC_HIDDEN,), jnp.float32) * 0.01
    fc2_w = (jax.random.normal(keys[5], (FC_HIDDEN, 1), jnp.float32)
             * (1.0 / np.sqrt(FC_HIDDEN)))
    fc2_b = 0.05

    # BatchNorm1d (eval): fold running stats + affine into scale/shift
    bn_gamma, bn_beta = 1.0, 0.0
    bn_mean, bn_var, bn_eps = 0.05, 0.9, 1e-5
    bn_scale = float(bn_gamma / np.sqrt(bn_var + bn_eps))
    bn_shift = float(bn_beta - bn_mean * bn_scale)

    # ---- host-side folding of conv1(pad=1) shifts + conv2(band) + bn + fc1 ----
    w2_np = np.asarray(w2, np.float32)
    fc1w_np = np.asarray(fc1_w, np.float32)
    fc1w_eeg_np = fc1w_np[:LINEAR_INPUT, :]          # (32, 64)
    fc1w_psd_np = fc1w_np[LINEAR_INPUT:, :]          # (74, 64)

    # Per-tap banded conv2 weights acting on the UNPADDED eeg positions
    # (the k-1 offset realises conv1's padding=1; out-of-range taps drop out).
    band = np.zeros((3, DATA_SAMPLE_SIZE, LINEAR_INPUT), np.float32)
    for k in range(3):
        for j in range(LINEAR_INPUT):
            for m in range(K2):
                s = j * S2 + m + k - 1
                if 0 <= s < DATA_SAMPLE_SIZE:
                    band[k, s, j] += w2_np[m]
    weeg_np = (bn_scale * np.einsum("ksj,jo->kso", band, fc1w_eeg_np)
               ).astype(np.float32)                  # (3, 376, 64)

    # Per-tap psd shifts folded straight into fc1's psd block.
    wpsd_big = np.zeros((3, PSD_IN_LEN, FC_HIDDEN), np.float32)
    for k in range(3):
        wpsd_big[k, k:k + PSD_SIZE, :] = fc1w_psd_np

    # All scalar biases (b1, b2, bn_shift, bpsd) absorbed into one fc1 bias.
    c_const = bn_scale * (b2 + b1 * float(w2_np.sum())) + bn_shift
    fc1b_eff = (np.asarray(fc1_b, np.float32)
                + np.float32(c_const) * fc1w_eeg_np.sum(axis=0)
                + np.float32(bpsd) * fc1w_psd_np.sum(axis=0)).astype(np.float32)

    params = {
        "fc2b": jnp.array([fc2_b], jnp.float32),            # (1,) SMEM scalar
        "w1t": jnp.asarray(w1.T),                            # (3, 62)
        "wpsdt": jnp.asarray(wpsd.T),                        # (3, 62)
        "weeg": jnp.asarray(weeg_np),                        # (3, 376, 64)
        "wpsd": jnp.asarray(wpsd_big),                       # (3, 76, 64)
        "fc1b_eff": jnp.asarray(fc1b_eff.reshape(1, FC_HIDDEN)),
        "fc2w": fc2_w,                                       # (64, 1)
    }
    raw = {"w1": w1, "b1": b1, "w2": w2, "b2": b2, "wpsd": wpsd, "bpsd": bpsd,
           "fc1_w": fc1_w, "fc1_b": fc1_b, "fc2_w": fc2_w, "fc2_b": fc2_b,
           "bn_scale": bn_scale, "bn_shift": bn_shift}

    # inputs: eeg (B, 62, 376), psd (B, 62, 76)  -- PyTorch NCL layout
    eeg = jax.random.normal(keys[6], (BATCH, IN_CHANNELS, DATA_SAMPLE_SIZE),
                            jnp.float32)
    psd = jax.random.normal(keys[7], (BATCH, IN_CHANNELS, PSD_IN_LEN),
                            jnp.float32)

    out = eeg_classifier_forward(eeg, psd, params)
    out = jax.block_until_ready(out)

    ref = jax.block_until_ready(reference_forward(eeg, psd, raw))
    assert out.shape == (BATCH, 1)
    np.testing.assert_allclose(np.asarray(out), np.asarray(ref),
                               atol=1e-4, rtol=1e-4)
    print("KERNEL_OK")
</pallas_src>

<mosaic_0001>
module attributes {stable_mosaic.version = 11 : i64} {
  func.func @eeg_kernel(%arg0: i32, %arg1: memref<1xf32, #tpu.memory_space<smem>>, %arg2: memref<8x62x376xf32, #tpu.memory_space<vmem>>, %arg3: memref<8x62x76xf32, #tpu.memory_space<vmem>>, %arg4: memref<3x62xf32, #tpu.memory_space<vmem>>, %arg5: memref<3x62xf32, #tpu.memory_space<vmem>>, %arg6: memref<3x376x64xf32, #tpu.memory_space<vmem>>, %arg7: memref<3x76x64xf32, #tpu.memory_space<vmem>>, %arg8: memref<1x64xf32, #tpu.memory_space<vmem>>, %arg9: memref<64x1xf32, #tpu.memory_space<vmem>>, %arg10: memref<8x1xf32, #tpu.memory_space<vmem>>) attributes {dimension_semantics = [#tpu.dimension_semantics<arbitrary>], iteration_bounds = array<i64: 1>, scalar_prefetch = 0 : i64, scratch_operands = 0 : i64, tpu.core_type = #tpu.core_type<tc>, window_params = [{transform_indices = @transform_0, window_bounds = array<i64: 1>}, {pipeline_mode = #tpu.pipeline_mode<synchronous>, transform_indices = @transform_1, window_bounds = array<i64: 8, 62, 376>}, {pipeline_mode = #tpu.pipeline_mode<synchronous>, transform_indices = @transform_2, window_bounds = array<i64: 8, 62, 76>}, {pipeline_mode = #tpu.pipeline_mode<synchronous>, transform_indices = @transform_3, window_bounds = array<i64: 3, 62>}, {pipeline_mode = #tpu.pipeline_mode<synchronous>, transform_indices = @transform_4, window_bounds = array<i64: 3, 62>}, {pipeline_mode = #tpu.pipeline_mode<synchronous>, transform_indices = @transform_5, window_bounds = array<i64: 3, 376, 64>}, {pipeline_mode = #tpu.pipeline_mode<synchronous>, transform_indices = @transform_6, window_bounds = array<i64: 3, 76, 64>}, {pipeline_mode = #tpu.pipeline_mode<synchronous>, transform_indices = @transform_7, window_bounds = array<i64: 1, 64>}, {pipeline_mode = #tpu.pipeline_mode<synchronous>, transform_indices = @transform_8, window_bounds = array<i64: 64, 1>}, {pipeline_mode = #tpu.pipeline_mode<synchronous>, transform_indices = @transform_9, window_bounds = array<i64: 8, 1>}]} {
    %c0 = arith.constant 0 : index
    %c0_0 = arith.constant 0 : index
    %0 = vector.load %arg4[%c0, %c0_0] : memref<3x62xf32, #tpu.memory_space<vmem>>, vector<3x62xf32>
    %1 = vector.shape_cast %0 : vector<3x62xf32> to vector<1x3x62xf32>
    %2 = vector.shape_cast %1 : vector<1x3x62xf32> to vector<1x3x62xf32>
    %3 = vector.broadcast %2 : vector<1x3x62xf32> to vector<8x3x62xf32>
    %c0_1 = arith.constant 0 : index
    %c0_2 = arith.constant 0 : index
    %c0_3 = arith.constant 0 : index
    %4 = vector.load %arg2[%c0_1, %c0_2, %c0_3] : memref<8x62x376xf32, #tpu.memory_space<vmem>>, vector<8x62x376xf32>
    "tpu.trace_start"() <{level = 10 : i32, message = "bkc,bct->bkt"}> : () -> ()
    %cst = arith.constant dense<0.000000e+00> : vector<8x3x376xf32>
    %5 = tpu.matmul %3, %4, %cst {dimension_numbers = #tpu.dot_dimension_numbers<[2], [1], [1], [2], [0, 0, 0, 1, 1, 2], [0], [0]>} : vector<8x3x62xf32>, vector<8x62x376xf32>, vector<8x3x376xf32> -> vector<8x3x376xf32>
    "tpu.trace_stop"() : () -> ()
    %c0_4 = arith.constant 0 : index
    %c0_5 = arith.constant 0 : index
    %6 = vector.load %arg5[%c0_4, %c0_5] : memref<3x62xf32, #tpu.memory_space<vmem>>, vector<3x62xf32>
    %7 = vector.shape_cast %6 : vector<3x62xf32> to vector<1x3x62xf32>
    %8 = vector.shape_cast %7 : vector<1x3x62xf32> to vector<1x3x62xf32>
    %9 = vector.broadcast %8 : vector<1x3x62xf32> to vector<8x3x62xf32>
    %c0_6 = arith.constant 0 : index
    %c0_7 = arith.constant 0 : index
    %c0_8 = arith.constant 0 : index
    %10 = vector.load %arg3[%c0_6, %c0_7, %c0_8] : memref<8x62x76xf32, #tpu.memory_space<vmem>>, vector<8x62x76xf32>
    "tpu.trace_start"() <{level = 10 : i32, message = "bkc,bct->bkt"}> : () -> ()
    %cst_9 = arith.constant dense<0.000000e+00> : vector<8x3x76xf32>
    %11 = tpu.matmul %9, %10, %cst_9 {dimension_numbers = #tpu.dot_dimension_numbers<[2], [1], [1], [2], [0, 0, 0, 1, 1, 2], [0], [0]>} : vector<8x3x62xf32>, vector<8x62x76xf32>, vector<8x3x76xf32> -> vector<8x3x76xf32>
    "tpu.trace_stop"() : () -> ()
    %c0_10 = arith.constant 0 : index
    %c0_11 = arith.constant 0 : index
    %12 = vector.load %arg8[%c0_10, %c0_11] : memref<1x64xf32, #tpu.memory_space<vmem>>, vector<1x64xf32>
    %13 = vector.shape_cast %12 : vector<1x64xf32> to vector<1x64xf32>
    %14 = vector.broadcast %13 : vector<1x64xf32> to vector<8x64xf32>
    %15 = vector.extract_strided_slice %5 {offsets = [0, 0, 0], sizes = [8, 1, 376], strides = [1, 1, 1]} : vector<8x3x376xf32> to vector<8x1x376xf32>
    %16 = vector.shape_cast %15 : vector<8x1x376xf32> to vector<8x376xf32>
    %c0_12 = arith.constant 0 : index
    %c0_13 = arith.constant 0 : index
    %c0_14 = arith.constant 0 : index
    %17 = vector.load %arg6[%c0_12, %c0_13, %c0_14] : memref<3x376x64xf32, #tpu.memory_space<vmem>>, vector<1x376x64xf32>
    %18 = vector.shape_cast %17 : vector<1x376x64xf32> to vector<376x64xf32>
    %cst_15 = arith.constant dense<0.000000e+00> : vector<8x64xf32>
    %19 = tpu.matmul %16, %18, %cst_15 {dimension_numbers = #tpu.dot_dimension_numbers<[1], [0], [0], [1], [0, 0, 1, 1], [], []>} : vector<8x376xf32>, vector<376x64xf32>, vector<8x64xf32> -> vector<8x64xf32>
    %20 = arith.addf %14, %19 : vector<8x64xf32>
    %21 = vector.extract_strided_slice %11 {offsets = [0, 0, 0], sizes = [8, 1, 76], strides = [1, 1, 1]} : vector<8x3x76xf32> to vector<8x1x76xf32>
    %22 = vector.shape_cast %21 : vector<8x1x76xf32> to vector<8x76xf32>
    %c0_16 = arith.constant 0 : index
    %c0_17 = arith.constant 0 : index
    %c0_18 = arith.constant 0 : index
    %23 = vector.load %arg7[%c0_16, %c0_17, %c0_18] : memref<3x76x64xf32, #tpu.memory_space<vmem>>, vector<1x76x64xf32>
    %24 = vector.shape_cast %23 : vector<1x76x64xf32> to vector<76x64xf32>
    %cst_19 = arith.constant dense<0.000000e+00> : vector<8x64xf32>
    %25 = tpu.matmul %22, %24, %cst_19 {dimension_numbers = #tpu.dot_dimension_numbers<[1], [0], [0], [1], [0, 0, 1, 1], [], []>} : vector<8x76xf32>, vector<76x64xf32>, vector<8x64xf32> -> vector<8x64xf32>
    %26 = arith.addf %20, %25 : vector<8x64xf32>
    %27 = vector.extract_strided_slice %5 {offsets = [0, 1, 0], sizes = [8, 1, 376], strides = [1, 1, 1]} : vector<8x3x376xf32> to vector<8x1x376xf32>
    %28 = vector.shape_cast %27 : vector<8x1x376xf32> to vector<8x376xf32>
    %c1 = arith.constant 1 : index
    %c0_20 = arith.constant 0 : index
    %c0_21 = arith.constant 0 : index
    %29 = vector.load %arg6[%c1, %c0_20, %c0_21] : memref<3x376x64xf32, #tpu.memory_space<vmem>>, vector<1x376x64xf32>
    %30 = vector.shape_cast %29 : vector<1x376x64xf32> to vector<376x64xf32>
    %cst_22 = arith.constant dense<0.000000e+00> : vector<8x64xf32>
    %31 = tpu.matmul %28, %30, %cst_22 {dimension_numbers = #tpu.dot_dimension_numbers<[1], [0], [0], [1], [0, 0, 1, 1], [], []>} : vector<8x376xf32>, vector<376x64xf32>, vector<8x64xf32> -> vector<8x64xf32>
    %32 = arith.addf %26, %31 : vector<8x64xf32>
    %33 = vector.extract_strided_slice %11 {offsets = [0, 1, 0], sizes = [8, 1, 76], strides = [1, 1, 1]} : vector<8x3x76xf32> to vector<8x1x76xf32>
    %34 = vector.shape_cast %33 : vector<8x1x76xf32> to vector<8x76xf32>
    %c1_23 = arith.constant 1 : index
    %c0_24 = arith.constant 0 : index
    %c0_25 = arith.constant 0 : index
    %35 = vector.load %arg7[%c1_23, %c0_24, %c0_25] : memref<3x76x64xf32, #tpu.memory_space<vmem>>, vector<1x76x64xf32>
    %36 = vector.shape_cast %35 : vector<1x76x64xf32> to vector<76x64xf32>
    %cst_26 = arith.constant dense<0.000000e+00> : vector<8x64xf32>
    %37 = tpu.matmul %34, %36, %cst_26 {dimension_numbers = #tpu.dot_dimension_numbers<[1], [0], [0], [1], [0, 0, 1, 1], [], []>} : vector<8x76xf32>, vector<76x64xf32>, vector<8x64xf32> -> vector<8x64xf32>
    %38 = arith.addf %32, %37 : vector<8x64xf32>
    %39 = vector.extract_strided_slice %5 {offsets = [0, 2, 0], sizes = [8, 1, 376], strides = [1, 1, 1]} : vector<8x3x376xf32> to vector<8x1x376xf32>
    %40 = vector.shape_cast %39 : vector<8x1x376xf32> to vector<8x376xf32>
    %c2 = arith.constant 2 : index
    %c0_27 = arith.constant 0 : index
    %c0_28 = arith.constant 0 : index
    %41 = vector.load %arg6[%c2, %c0_27, %c0_28] : memref<3x376x64xf32, #tpu.memory_space<vmem>>, vector<1x376x64xf32>
    %42 = vector.shape_cast %41 : vector<1x376x64xf32> to vector<376x64xf32>
    %cst_29 = arith.constant dense<0.000000e+00> : vector<8x64xf32>
    %43 = tpu.matmul %40, %42, %cst_29 {dimension_numbers = #tpu.dot_dimension_numbers<[1], [0], [0], [1], [0, 0, 1, 1], [], []>} : vector<8x376xf32>, vector<376x64xf32>, vector<8x64xf32> -> vector<8x64xf32>
    %44 = arith.addf %38, %43 : vector<8x64xf32>
    %45 = vector.extract_strided_slice %11 {offsets = [0, 2, 0], sizes = [8, 1, 76], strides = [1, 1, 1]} : vector<8x3x76xf32> to vector<8x1x76xf32>
    %46 = vector.shape_cast %45 : vector<8x1x76xf32> to vector<8x76xf32>
    %c2_30 = arith.constant 2 : index
    %c0_31 = arith.constant 0 : index
    %c0_32 = arith.constant 0 : index
    %47 = vector.load %arg7[%c2_30, %c0_31, %c0_32] : memref<3x76x64xf32, #tpu.memory_space<vmem>>, vector<1x76x64xf32>
    %48 = vector.shape_cast %47 : vector<1x76x64xf32> to vector<76x64xf32>
    %cst_33 = arith.constant dense<0.000000e+00> : vector<8x64xf32>
    %49 = tpu.matmul %46, %48, %cst_33 {dimension_numbers = #tpu.dot_dimension_numbers<[1], [0], [0], [1], [0, 0, 1, 1], [], []>} : vector<8x76xf32>, vector<76x64xf32>, vector<8x64xf32> -> vector<8x64xf32>
    %50 = arith.addf %44, %49 : vector<8x64xf32>
    %cst_34 = arith.constant 0.000000e+00 : f32
    %51 = vector.broadcast %cst_34 : f32 to vector<8x64xf32>
    %52 = arith.maximumf %50, %51 : vector<8x64xf32>
    %c0_35 = arith.constant 0 : index
    %c0_36 = arith.constant 0 : index
    %53 = vector.load %arg9[%c0_35, %c0_36] : memref<64x1xf32, #tpu.memory_space<vmem>>, vector<64x1xf32>
    %cst_37 = arith.constant dense<0.000000e+00> : vector<8x1xf32>
    %54 = tpu.matmul %52, %53, %cst_37 {dimension_numbers = #tpu.dot_dimension_numbers<[1], [0], [0], [1], [0, 0, 1, 1], [], []>} : vector<8x64xf32>, vector<64x1xf32>, vector<8x1xf32> -> vector<8x1xf32>
    %c0_38 = arith.constant 0 : index
    %55 = memref.load %arg1[%c0_38] : memref<1xf32, #tpu.memory_space<smem>>
    %56 = vector.broadcast %55 : f32 to vector<8x1xf32>
    %57 = arith.addf %54, %56 : vector<8x1xf32>
    %58 = arith.negf %57 : vector<8x1xf32>
    %59 = math.exp %58 : vector<8x1xf32>
    %cst_39 = arith.constant 1.000000e+00 : f32
    %60 = vector.broadcast %cst_39 : f32 to vector<8x1xf32>
    %61 = arith.addf %60, %59 : vector<8x1xf32>
    %62 = arith.divf %60, %61 : vector<8x1xf32>
    %c0_40 = arith.constant 0 : index
    %c0_41 = arith.constant 0 : index
    %63 = vector.load %arg10[%c0_40, %c0_41] : memref<8x1xf32, #tpu.memory_space<vmem>>, vector<8x1xf32>
    tpu.vector_store %arg10[%c0_40, %c0_41], %62 {strides = array<i32>} : memref<8x1xf32, #tpu.memory_space<vmem>>, vector<8x1xf32>,
    return
  }
  func.func @transform_0(%arg0: i32) -> i32 {
    %c0_i32 = arith.constant 0 : i32
    %c0_i32_0 = arith.constant 0 : i32
    return %c0_i32 : i32
  }
  func.func @transform_1(%arg0: i32) -> (i32, i32, i32) {
    %c0_i32 = arith.constant 0 : i32
    %c0_i32_0 = arith.constant 0 : i32
    %c0_i32_1 = arith.constant 0 : i32
    %c0_i32_2 = arith.constant 0 : i32
    return %c0_i32, %c0_i32_0, %c0_i32_1 : i32, i32, i32
  }
  func.func @transform_2(%arg0: i32) -> (i32, i32, i32) {
    %c0_i32 = arith.constant 0 : i32
    %c0_i32_0 = arith.constant 0 : i32
    %c0_i32_1 = arith.constant 0 : i32
    %c0_i32_2 = arith.constant 0 : i32
    return %c0_i32, %c0_i32_0, %c0_i32_1 : i32, i32, i32
  }
  func.func @transform_3(%arg0: i32) -> (i32, i32) {
    %c0_i32 = arith.constant 0 : i32
    %c0_i32_0 = arith.constant 0 : i32
    %c0_i32_1 = arith.constant 0 : i32
    return %c0_i32, %c0_i32_0 : i32, i32
  }
  func.func @transform_4(%arg0: i32) -> (i32, i32) {
    %c0_i32 = arith.constant 0 : i32
    %c0_i32_0 = arith.constant 0 : i32
    %c0_i32_1 = arith.constant 0 : i32
    return %c0_i32, %c0_i32_0 : i32, i32
  }
  func.func @transform_5(%arg0: i32) -> (i32, i32, i32) {
    %c0_i32 = arith.constant 0 : i32
    %c0_i32_0 = arith.constant 0 : i32
    %c0_i32_1 = arith.constant 0 : i32
    %c0_i32_2 = arith.constant 0 : i32
    return %c0_i32, %c0_i32_0, %c0_i32_1 : i32, i32, i32
  }
  func.func @transform_6(%arg0: i32) -> (i32, i32, i32) {
    %c0_i32 = arith.constant 0 : i32
    %c0_i32_0 = arith.constant 0 : i32
    %c0_i32_1 = arith.constant 0 : i32
    %c0_i32_2 = arith.constant 0 : i32
    return %c0_i32, %c0_i32_0, %c0_i32_1 : i32, i32, i32
  }
  func.func @transform_7(%arg0: i32) -> (i32, i32) {
    %c0_i32 = arith.constant 0 : i32
    %c0_i32_0 = arith.constant 0 : i32
    %c0_i32_1 = arith.constant 0 : i32
    return %c0_i32, %c0_i32_0 : i32, i32
  }
  func.func @transform_8(%arg0: i32) -> (i32, i32) {
    %c0_i32 = arith.constant 0 : i32
    %c0_i32_0 = arith.constant 0 : i32
    %c0_i32_1 = arith.constant 0 : i32
    return %c0_i32, %c0_i32_0 : i32, i32
  }
  func.func @transform_9(%arg0: i32) -> (i32, i32) {
    %c0_i32 = arith.constant 0 : i32
    %c0_i32_0 = arith.constant 0 : i32
    %c0_i32_1 = arith.constant 0 : i32
    return %c0_i32, %c0_i32_0 : i32, i32
  }
}

</mosaic_0001>

<llo_original>
// kernel: tpu_custom_call.1
$region0: #{tpu_custom_call.1}
  #allocation0 [shape = 'u32[]', space=smem, size = 0x4, offset = 0x4, fixed_abs, tag = 'smem constant byte address 0x4 - core index']
  #allocation1 [shape = 'u32[72,128]{1,0:T(1,128)}', space=vmem, size = 0x9000, scoped, tag = 'internal scratch']
  #allocation2 [shape = 'f32[1]{0:T(128)S(6)}', space=smem, size = 0x200, scoped, tag = 'scoped memory for tpu_custom_call.1']
  %s0 = inlined_call_operand.<no memory space> [shape: f32[1], index: 0, kind: input, shape index: {}]
  %s1 = inlined_call_operand.vmem [shape: f32[8,62,376], index: 1, kind: input, shape index: {}]
  %s2 = inlined_call_operand.vmem [shape: f32[8,62,76], index: 2, kind: input, shape index: {}]
  %s3 = inlined_call_operand.vmem [shape: f32[3,62], index: 3, kind: input, shape index: {}]
  %s4 = inlined_call_operand.vmem [shape: f32[3,62], index: 4, kind: input, shape index: {}]
  %s5 = inlined_call_operand.vmem [shape: f32[3,376,64], index: 5, kind: input, shape index: {}]
  %s6 = inlined_call_operand.vmem [shape: f32[3,76,64], index: 6, kind: input, shape index: {}]
  %s7 = inlined_call_operand.vmem [shape: f32[1,64], index: 7, kind: input, shape index: {}]
  %s8 = inlined_call_operand.vmem [shape: f32[64,1], index: 8, kind: input, shape index: {}]
  %s9 = inlined_call_operand.vmem [shape: f32[8,1], index: 9, kind: output, shape index: {}]
  %s10 = sld [smem:[#allocation0]]
  $region46: #{tpu_custom_call.1} parent=0
    _
  %s12 = ssub.s32 1, %s10
  %s13 = scalar_select 0, %s12, %s10
  %14 = sst [smem:[#allocation2]] %s0
  // Predicated region
  $region2: #{tpu_custom_call.1} parent=0 // pred_check
    _
  $region3: #{tpu_custom_call.1} parent=0 // pred_check_branch
    %16 = sbr.rel (0) target = $region5
  $region4: #{tpu_custom_call.1} parent=0 // pred_region
    _
  $region5: #{tpu_custom_call.1} parent=0 // pred_fallthru
    _
  // Predicated region
  $region6: #{tpu_custom_call.1} parent=0 // pred_check
    _
  $region7: #{tpu_custom_call.1} parent=0 // pred_check_branch
    %18 = sbr.rel (0) target = $region9
  $region8: #{tpu_custom_call.1} parent=0 // pred_region
    _
  $region9: #{tpu_custom_call.1} parent=0 // pred_fallthru
    _
  // Predicated region
  $region10: #{tpu_custom_call.1} parent=0 // pred_check
    _
  $region11: #{tpu_custom_call.1} parent=0 // pred_check_branch
    %20 = sbr.rel (0) target = $region13
  $region12: #{tpu_custom_call.1} parent=0 // pred_region
    _
  $region13: #{tpu_custom_call.1} parent=0 // pred_fallthru
    _
  // Predicated region
  $region14: #{tpu_custom_call.1} parent=0 // pred_check
    _
  $region15: #{tpu_custom_call.1} parent=0 // pred_check_branch
    %22 = sbr.rel (0) target = $region17
  $region16: #{tpu_custom_call.1} parent=0 // pred_region
    _
  $region17: #{tpu_custom_call.1} parent=0 // pred_fallthru
    _
  // Predicated region
  $region18: #{tpu_custom_call.1} parent=0 // pred_check
    _
  $region19: #{tpu_custom_call.1} parent=0 // pred_check_branch
    %24 = sbr.rel (0) target = $region21
  $region20: #{tpu_custom_call.1} parent=0 // pred_region
    _
  $region21: #{tpu_custom_call.1} parent=0 // pred_fallthru
    _
  // Predicated region
  $region22: #{tpu_custom_call.1} parent=0 // pred_check
    _
  $region23: #{tpu_custom_call.1} parent=0 // pred_check_branch
    %26 = sbr.rel (0) target = $region25
  $region24: #{tpu_custom_call.1} parent=0 // pred_region
    _
  $region25: #{tpu_custom_call.1} parent=0 // pred_fallthru
    _
  // Predicated region
  $region26: #{tpu_custom_call.1} parent=0 // pred_check
    _
  $region27: #{tpu_custom_call.1} parent=0 // pred_check_branch
    %28 = sbr.rel (0) target = $region29
  $region28: #{tpu_custom_call.1} parent=0 // pred_region
    _
  $region29: #{tpu_custom_call.1} parent=0 // pred_fallthru
    _
  // Predicated region
  $region30: #{tpu_custom_call.1} parent=0 // pred_check
    _
  $region31: #{tpu_custom_call.1} parent=0 // pred_check_branch
    %30 = sbr.rel (0) target = $region33
  $region32: #{tpu_custom_call.1} parent=0 // pred_region
    _
  $region33: #{tpu_custom_call.1} parent=0 // pred_fallthru
    _
  // Predicated region
  $region34: #{tpu_custom_call.1} parent=0 // pred_check
    _
  $region35: #{tpu_custom_call.1} parent=0 // pred_check_branch
    %32 = sbr.rel (0) target = $region37
  $region36: #{tpu_custom_call.1} parent=0 // pred_region
    _
  $region37: #{tpu_custom_call.1} parent=0 // pred_fallthru
    _
  %v33 = vld [vmem:[%s3] sm:$0x7]
  %v34 = vld [vmem:[%s1] sm:$0xff]
  %v35 = vld [vmem:[%s1 + $0x8] sm:$0xff]
  %v36 = vld [vmem:[%s1 + $0x10] sm:$0xff]
  %v37 = vld [vmem:[%s1 + $0x18] sm:$0xff]
  %v38 = vld [vmem:[%s1 + $0x20] sm:$0xff]
  %v39 = vld [vmem:[%s1 + $0x28] sm:$0xff]
  %v40 = vld [vmem:[%s1 + $0x30] sm:$0xff]
  %v41 = vld [vmem:[%s1 + $0x38] sm:$0xff]
  %v42 = vld [vmem:[%s1 + $0x40] sm:$0xff]
  %v43 = vld [vmem:[%s1 + $0x48] sm:$0xff]
  %v44 = vld [vmem:[%s1 + $0x50] sm:$0xff]
  %v45 = vld [vmem:[%s1 + $0x58] sm:$0xff]
  %v46 = vld [vmem:[%s1 + $0x60] sm:$0xff]
  %v47 = vld [vmem:[%s1 + $0x68] sm:$0xff]
  %v48 = vld [vmem:[%s1 + $0x70] sm:$0xff]
  %v49 = vld [vmem:[%s1 + $0x78] sm:$0xff]
  %v50 = vld [vmem:[%s1 + $0x80] sm:$0xff]
  %v51 = vld [vmem:[%s1 + $0x88] sm:$0xff]
  %v52 = vld [vmem:[%s1 + $0x90] sm:$0xff]
  %v53 = vld [vmem:[%s1 + $0x98] sm:$0xff]
  %v54 = vld [vmem:[%s1 + $0xa0] sm:$0xff]
  %v55 = vld [vmem:[%s1 + $0xa8] sm:$0x3f]
  %v56 = vld [vmem:[%s1 + $0xb0] sm:$0x3f]
  %v57 = vld [vmem:[%s1 + $0xb8] sm:$0x3f]
  %v58 = vld [vmem:[%s1 + $0xc0] sm:$0xff]
  %v59 = vld [vmem:[%s1 + $0xc8] sm:$0xff]
  %v60 = vld [vmem:[%s1 + $0xd0] sm:$0xff]
  %v61 = vld [vmem:[%s1 + $0xd8] sm:$0xff]
  %v62 = vld [vmem:[%s1 + $0xe0] sm:$0xff]
  %v63 = vld [vmem:[%s1 + $0xe8] sm:$0xff]
  %v64 = vld [vmem:[%s1 + $0xf0] sm:$0xff]
  %v65 = vld [vmem:[%s1 + $0xf8] sm:$0xff]
  %v66 = vld [vmem:[%s1 + $0x100] sm:$0xff]
  %v67 = vld [vmem:[%s1 + $0x108] sm:$0xff]
  %v68 = vld [vmem:[%s1 + $0x110] sm:$0xff]
  %v69 = vld [vmem:[%s1 + $0x118] sm:$0xff]
  %v70 = vld [vmem:[%s1 + $0x120] sm:$0xff]
  %v71 = vld [vmem:[%s1 + $0x128] sm:$0xff]
  %v72 = vld [vmem:[%s1 + $0x130] sm:$0xff]
  %v73 = vld [vmem:[%s1 + $0x138] sm:$0xff]
  %v74 = vld [vmem:[%s1 + $0x140] sm:$0xff]
  %v75 = vld [vmem:[%s1 + $0x148] sm:$0xff]
  %v76 = vld [vmem:[%s1 + $0x150] sm:$0xff]
  %v77 = vld [vmem:[%s1 + $0x158] sm:$0xff]
  %v78 = vld [vmem:[%s1 + $0x160] sm:$0xff]
  %v79 = vld [vmem:[%s1 + $0x168] sm:$0x3f]
  %v80 = vld [vmem:[%s1 + $0x170] sm:$0x3f]
  %v81 = vld [vmem:[%s1 + $0x178] sm:$0x3f]
  %v82 = vld [vmem:[%s1 + $0x180] sm:$0xff]
  %v83 = vld [vmem:[%s1 + $0x188] sm:$0xff]
  %v84 = vld [vmem:[%s1 + $0x190] sm:$0xff]
  %v85 = vld [vmem:[%s1 + $0x198] sm:$0xff]
  %v86 = vld [vmem:[%s1 + $0x1a0] sm:$0xff]
  %v87 = vld [vmem:[%s1 + $0x1a8] sm:$0xff]
  %v88 = vld [vmem:[%s1 + $0x1b0] sm:$0xff]
  %v89 = vld [vmem:[%s1 + $0x1b8] sm:$0xff]
  %v90 = vld [vmem:[%s1 + $0x1c0] sm:$0xff]
  %v91 = vld [vmem:[%s1 + $0x1c8] sm:$0xff]
  %v92 = vld [vmem:[%s1 + $0x1d0] sm:$0xff]
  %v93 = vld [vmem:[%s1 + $0x1d8] sm:$0xff]
  %v94 = vld [vmem:[%s1 + $0x1e0] sm:$0xff]
  %v95 = vld [vmem:[%s1 + $0x1e8] sm:$0xff]
  %v96 = vld [vmem:[%s1 + $0x1f0] sm:$0xff]
  %v97 = vld [vmem:[%s1 + $0x1f8] sm:$0xff]
  %v98 = vld [vmem:[%s1 + $0x200] sm:$0xff]
  %v99 = vld [vmem:[%s1 + $0x208] sm:$0xff]
  %v100 = vld [vmem:[%s1 + $0x210] sm:$0xff]
  %v101 = vld [vmem:[%s1 + $0x218] sm:$0xff]
  %v102 = vld [vmem:[%s1 + $0x220] sm:$0xff]
  %v103 = vld [vmem:[%s1 + $0x228] sm:$0x3f]
  %v104 = vld [vmem:[%s1 + $0x230] sm:$0x3f]
  %v105 = vld [vmem:[%s1 + $0x238] sm:$0x3f]
  %v106 = vld [vmem:[%s1 + $0x240] sm:$0xff]
  %v107 = vld [vmem:[%s1 + $0x248] sm:$0xff]
  %v108 = vld [vmem:[%s1 + $0x250] sm:$0xff]
  %v109 = vld [vmem:[%s1 + $0x258] sm:$0xff]
  %v110 = vld [vmem:[%s1 + $0x260] sm:$0xff]
  %v111 = vld [vmem:[%s1 + $0x268] sm:$0xff]
  %v112 = vld [vmem:[%s1 + $0x270] sm:$0xff]
  %v113 = vld [vmem:[%s1 + $0x278] sm:$0xff]
  %v114 = vld [vmem:[%s1 + $0x280] sm:$0xff]
  %v115 = vld [vmem:[%s1 + $0x288] sm:$0xff]
  %v116 = vld [vmem:[%s1 + $0x290] sm:$0xff]
  %v117 = vld [vmem:[%s1 + $0x298] sm:$0xff]
  %v118 = vld [vmem:[%s1 + $0x2a0] sm:$0xff]
  %v119 = vld [vmem:[%s1 + $0x2a8] sm:$0xff]
  %v120 = vld [vmem:[%s1 + $0x2b0] sm:$0xff]
  %v121 = vld [vmem:[%s1 + $0x2b8] sm:$0xff]
  %v122 = vld [vmem:[%s1 + $0x2c0] sm:$0xff]
  %v123 = vld [vmem:[%s1 + $0x2c8] sm:$0xff]
  %v124 = vld [vmem:[%s1 + $0x2d0] sm:$0xff]
  %v125 = vld [vmem:[%s1 + $0x2d8] sm:$0xff]
  %v126 = vld [vmem:[%s1 + $0x2e0] sm:$0xff]
  %v127 = vld [vmem:[%s1 + $0x2e8] sm:$0x3f]
  %v128 = vld [vmem:[%s1 + $0x2f0] sm:$0x3f]
  %v129 = vld [vmem:[%s1 + $0x2f8] sm:$0x3f]
  %v130 = vld [vmem:[%s1 + $0x300] sm:$0xff]
  %v131 = vld [vmem:[%s1 + $0x308] sm:$0xff]
  %v132 = vld [vmem:[%s1 + $0x310] sm:$0xff]
  %v133 = vld [vmem:[%s1 + $0x318] sm:$0xff]
  %v134 = vld [vmem:[%s1 + $0x320] sm:$0xff]
  %v135 = vld [vmem:[%s1 + $0x328] sm:$0xff]
  %v136 = vld [vmem:[%s1 + $0x330] sm:$0xff]
  %v137 = vld [vmem:[%s1 + $0x338] sm:$0xff]
  %v138 = vld [vmem:[%s1 + $0x340] sm:$0xff]
  %v139 = vld [vmem:[%s1 + $0x348] sm:$0xff]
  %v140 = vld [vmem:[%s1 + $0x350] sm:$0xff]
  %v141 = vld [vmem:[%s1 + $0x358] sm:$0xff]
  %v142 = vld [vmem:[%s1 + $0x360] sm:$0xff]
  %v143 = vld [vmem:[%s1 + $0x368] sm:$0xff]
  %v144 = vld [vmem:[%s1 + $0x370] sm:$0xff]
  %v145 = vld [vmem:[%s1 + $0x378] sm:$0xff]
  %v146 = vld [vmem:[%s1 + $0x380] sm:$0xff]
  %v147 = vld [vmem:[%s1 + $0x388] sm:$0xff]
  %v148 = vld [vmem:[%s1 + $0x390] sm:$0xff]
  %v149 = vld [vmem:[%s1 + $0x398] sm:$0xff]
  %v150 = vld [vmem:[%s1 + $0x3a0] sm:$0xff]
  %v151 = vld [vmem:[%s1 + $0x3a8] sm:$0x3f]
  %v152 = vld [vmem:[%s1 + $0x3b0] sm:$0x3f]
  %v153 = vld [vmem:[%s1 + $0x3b8] sm:$0x3f]
  %v154 = vld [vmem:[%s1 + $0x3c0] sm:$0xff]
  %v155 = vld [vmem:[%s1 + $0x3c8] sm:$0xff]
  %v156 = vld [vmem:[%s1 + $0x3d0] sm:$0xff]
  %v157 = vld [vmem:[%s1 + $0x3d8] sm:$0xff]
  %v158 = vld [vmem:[%s1 + $0x3e0] sm:$0xff]
  %v159 = vld [vmem:[%s1 + $0x3e8] sm:$0xff]
  %v160 = vld [vmem:[%s1 + $0x3f0] sm:$0xff]
  %v161 = vld [vmem:[%s1 + $0x3f8] sm:$0xff]
  %v162 = vld [vmem:[%s1 + $0x400] sm:$0xff]
  %v163 = vld [vmem:[%s1 + $0x408] sm:$0xff]
  %v164 = vld [vmem:[%s1 + $0x410] sm:$0xff]
  %v165 = vld [vmem:[%s1 + $0x418] sm:$0xff]
  %v166 = vld [vmem:[%s1 + $0x420] sm:$0xff]
  %v167 = vld [vmem:[%s1 + $0x428] sm:$0xff]
  %v168 = vld [vmem:[%s1 + $0x430] sm:$0xff]
  %v169 = vld [vmem:[%s1 + $0x438] sm:$0xff]
  %v170 = vld [vmem:[%s1 + $0x440] sm:$0xff]
  %v171 = vld [vmem:[%s1 + $0x448] sm:$0xff]
  %v172 = vld [vmem:[%s1 + $0x450] sm:$0xff]
  %v173 = vld [vmem:[%s1 + $0x458] sm:$0xff]
  %v174 = vld [vmem:[%s1 + $0x460] sm:$0xff]
  %v175 = vld [vmem:[%s1 + $0x468] sm:$0x3f]
  %v176 = vld [vmem:[%s1 + $0x470] sm:$0x3f]
  %v177 = vld [vmem:[%s1 + $0x478] sm:$0x3f]
  %v178 = vld [vmem:[%s1 + $0x480] sm:$0xff]
  %v179 = vld [vmem:[%s1 + $0x488] sm:$0xff]
  %v180 = vld [vmem:[%s1 + $0x490] sm:$0xff]
  %v181 = vld [vmem:[%s1 + $0x498] sm:$0xff]
  %v182 = vld [vmem:[%s1 + $0x4a0] sm:$0xff]
  %v183 = vld [vmem:[%s1 + $0x4a8] sm:$0xff]
  %v184 = vld [vmem:[%s1 + $0x4b0] sm:$0xff]
  %v185 = vld [vmem:[%s1 + $0x4b8] sm:$0xff]
  %v186 = vld [vmem:[%s1 + $0x4c0] sm:$0xff]
  %v187 = vld [vmem:[%s1 + $0x4c8] sm:$0xff]
  %v188 = vld [vmem:[%s1 + $0x4d0] sm:$0xff]
  %v189 = vld [vmem:[%s1 + $0x4d8] sm:$0xff]
  %v190 = vld [vmem:[%s1 + $0x4e0] sm:$0xff]
  %v191 = vld [vmem:[%s1 + $0x4e8] sm:$0xff]
  %v192 = vld [vmem:[%s1 + $0x4f0] sm:$0xff]
  %v193 = vld [vmem:[%s1 + $0x4f8] sm:$0xff]
  %v194 = vld [vmem:[%s1 + $0x500] sm:$0xff]
  %v195 = vld [vmem:[%s1 + $0x508] sm:$0xff]
  %v196 = vld [vmem:[%s1 + $0x510] sm:$0xff]
  %v197 = vld [vmem:[%s1 + $0x518] sm:$0xff]
  %v198 = vld [vmem:[%s1 + $0x520] sm:$0xff]
  %v199 = vld [vmem:[%s1 + $0x528] sm:$0x3f]
  %v200 = vld [vmem:[%s1 + $0x530] sm:$0x3f]
  %v201 = vld [vmem:[%s1 + $0x538] sm:$0x3f]
  %v202 = vld [vmem:[%s1 + $0x540] sm:$0xff]
  %v203 = vld [vmem:[%s1 + $0x548] sm:$0xff]
  %v204 = vld [vmem:[%s1 + $0x550] sm:$0xff]
  %v205 = vld [vmem:[%s1 + $0x558] sm:$0xff]
  %v206 = vld [vmem:[%s1 + $0x560] sm:$0xff]
  %v207 = vld [vmem:[%s1 + $0x568] sm:$0xff]
  %v208 = vld [vmem:[%s1 + $0x570] sm:$0xff]
  %v209 = vld [vmem:[%s1 + $0x578] sm:$0xff]
  %v210 = vld [vmem:[%s1 + $0x580] sm:$0xff]
  %v211 = vld [vmem:[%s1 + $0x588] sm:$0xff]
  %v212 = vld [vmem:[%s1 + $0x590] sm:$0xff]
  %v213 = vld [vmem:[%s1 + $0x598] sm:$0xff]
  %v214 = vld [vmem:[%s1 + $0x5a0] sm:$0xff]
  %v215 = vld [vmem:[%s1 + $0x5a8] sm:$0xff]
  %v216 = vld [vmem:[%s1 + $0x5b0] sm:$0xff]
  %v217 = vld [vmem:[%s1 + $0x5b8] sm:$0xff]
  %v218 = vld [vmem:[%s1 + $0x5c0] sm:$0xff]
  %v219 = vld [vmem:[%s1 + $0x5c8] sm:$0xff]
  %v220 = vld [vmem:[%s1 + $0x5d0] sm:$0xff]
  %v221 = vld [vmem:[%s1 + $0x5d8] sm:$0xff]
  %v222 = vld [vmem:[%s1 + $0x5e0] sm:$0xff]
  %v223 = vld [vmem:[%s1 + $0x5e8] sm:$0x3f]
  %v224 = vld [vmem:[%s1 + $0x5f0] sm:$0x3f]
  %v225 = vld [vmem:[%s1 + $0x5f8] sm:$0x3f]
  %vm226 = vcmask 506880
  %v228 = vsel %vm226, %v33, 0
  %vm230 = vcmask 1045504
  %v232 = vsel %vm230, %v55, 0
  %v235 = vsel %vm230, %v56, 0
  %v238 = vsel %vm230, %v57, 0
  %240 = vmatpush.msra.mxu0 0.0
  %241 = vmatpush.msra.mxu0 0.0
  %242 = vmatpush.msra.mxu0 0.0
  %243 = vmatpush.msra.mxu0 0.0
  %244 = vmatpush.msra.mxu0 0.0
  %245 = vmatpush.msra.mxu0 0.0
  %246 = vmatpush.msra.mxu0 0.0
  %247 = vmatpush.msra.mxu0 0.0
  %248 = vmatpush.msra.mxu0 %v232
  %249 = vmatpush.msra.mxu0 %v52
  %250 = vmatpush.msra.mxu0 %v49
  %251 = vmatpush.msra.mxu0 %v46
  %252 = vmatpush.msra.mxu0 %v43
  %253 = vmatpush.msra.mxu0 %v40
  %254 = vmatpush.msra.mxu0 %v37
  %255 = vmatpush.msra.mxu0 %v34
  %256 = vmatmul.f32.gmra.mxu0 %v228
  %v257 = vpop.f32.mrf.mxu0
  %v258 = vadd.f32 0.0, %v257
  %259 = vdwg.mxu0
  %260 = vmatpush.msra.mxu0 0.0
  %261 = vmatpush.msra.mxu0 0.0
  %262 = vmatpush.msra.mxu0 0.0
  %263 = vmatpush.msra.mxu0 0.0
  %264 = vmatpush.msra.mxu0 0.0
  %265 = vmatpush.msra.mxu0 0.0
  %266 = vmatpush.msra.mxu0 0.0
  %267 = vmatpush.msra.mxu0 0.0
  %268 = vmatpush.msra.mxu0 %v235
  %269 = vmatpush.msra.mxu0 %v53
  %270 = vmatpush.msra.mxu0 %v50
  %271 = vmatpush.msra.mxu0 %v47
  %272 = vmatpush.msra.mxu0 %v44
  %273 = vmatpush.msra.mxu0 %v41
  %274 = vmatpush.msra.mxu0 %v38
  %275 = vmatpush.msra.mxu0 %v35
  %276 = vmatmul.f32.gmra.mxu0 %v228
  %v277 = vpop.f32.mrf.mxu0
  %v278 = vadd.f32 0.0, %v277
  %279 = vdwg.mxu0
  %280 = vmatpush.msra.mxu0 0.0
  %281 = vmatpush.msra.mxu0 0.0
  %282 = vmatpush.msra.mxu0 0.0
  %283 = vmatpush.msra.mxu0 0.0
  %284 = vmatpush.msra.mxu0 0.0
  %285 = vmatpush.msra.mxu0 0.0
  %286 = vmatpush.msra.mxu0 0.0
  %287 = vmatpush.msra.mxu0 0.0
  %288 = vmatpush.msra.mxu0 %v238
  %289 = vmatpush.msra.mxu0 %v54
  %290 = vmatpush.msra.mxu0 %v51
  %291 = vmatpush.msra.mxu0 %v48
  %292 = vmatpush.msra.mxu0 %v45
  %293 = vmatpush.msra.mxu0 %v42
  %294 = vmatpush.msra.mxu0 %v39
  %295 = vmatpush.msra.mxu0 %v36
  %296 = vmatmul.f32.gmra.mxu0 %v228
  %v297 = vpop.f32.mrf.mxu0
  %v298 = vadd.f32 0.0, %v297
  %299 = vdwg.mxu0
  %v301 = vsel %vm230, %v79, 0
  %v304 = vsel %vm230, %v80, 0
  %v307 = vsel %vm230, %v81, 0
  %309 = vmatpush.msra.mxu0 0.0
  %310 = vmatpush.msra.mxu0 0.0
  %311 = vmatpush.msra.mxu0 0.0
  %312 = vmatpush.msra.mxu0 0.0
  %313 = vmatpush.msra.mxu0 0.0
  %314 = vmatpush.msra.mxu0 0.0
  %315 = vmatpush.msra.mxu0 0.0
  %316 = vmatpush.msra.mxu0 0.0
  %317 = vmatpush.msra.mxu0 %v301
  %318 = vmatpush.msra.mxu0 %v76
  %319 = vmatpush.msra.mxu0 %v73
  %320 = vmatpush.msra.mxu0 %v70
  %321 = vmatpush.msra.mxu0 %v67
  %322 = vmatpush.msra.mxu0 %v64
  %323 = vmatpush.msra.mxu0 %v61
  %324 = vmatpush.msra.mxu0 %v58
  %325 = vmatmul.f32.gmra.mxu0 %v228
  %v326 = vpop.f32.mrf.mxu0
  %v327 = vadd.f32 0.0, %v326
  %328 = vdwg.mxu0
  %329 = vmatpush.msra.mxu0 0.0
  %330 = vmatpush.msra.mxu0 0.0
  %331 = vmatpush.msra.mxu0 0.0
  %332 = vmatpush.msra.mxu0 0.0
  %333 = vmatpush.msra.mxu0 0.0
  %334 = vmatpush.msra.mxu0 0.0
  %335 = vmatpush.msra.mxu0 0.0
  %336 = vmatpush.msra.mxu0 0.0
  %337 = vmatpush.msra.mxu0 %v304
  %338 = vmatpush.msra.mxu0 %v77
  %339 = vmatpush.msra.mxu0 %v74
  %340 = vmatpush.msra.mxu0 %v71
  %341 = vmatpush.msra.mxu0 %v68
  %342 = vmatpush.msra.mxu0 %v65
  %343 = vmatpush.msra.mxu0 %v62
  %344 = vmatpush.msra.mxu0 %v59
  %345 = vmatmul.f32.gmra.mxu0 %v228
  %v346 = vpop.f32.mrf.mxu0
  %v347 = vadd.f32 0.0, %v346
  %348 = vdwg.mxu0
  %349 = vmatpush.msra.mxu0 0.0
  %350 = vmatpush.msra.mxu0 0.0
  %351 = vmatpush.msra.mxu0 0.0
  %352 = vmatpush.msra.mxu0 0.0
  %353 = vmatpush.msra.mxu0 0.0
  %354 = vmatpush.msra.mxu0 0.0
  %355 = vmatpush.msra.mxu0 0.0
  %356 = vmatpush.msra.mxu0 0.0
  %357 = vmatpush.msra.mxu0 %v307
  %358 = vmatpush.msra.mxu0 %v78
  %359 = vmatpush.msra.mxu0 %v75
  %360 = vmatpush.msra.mxu0 %v72
  %361 = vmatpush.msra.mxu0 %v69
  %362 = vmatpush.msra.mxu0 %v66
  %363 = vmatpush.msra.mxu0 %v63
  %364 = vmatpush.msra.mxu0 %v60
  %365 = vmatmul.f32.gmra.mxu0 %v228
  %v366 = vpop.f32.mrf.mxu0
  %v367 = vadd.f32 0.0, %v366
  %368 = vdwg.mxu0
  %v370 = vsel %vm230, %v103, 0
  %v373 = vsel %vm230, %v104, 0
  %v376 = vsel %vm230, %v105, 0
  %378 = vmatpush.msra.mxu0 0.0
  %379 = vmatpush.msra.mxu0 0.0
  %380 = vmatpush.msra.mxu0 0.0
  %381 = vmatpush.msra.mxu0 0.0
  %382 = vmatpush.msra.mxu0 0.0
  %383 = vmatpush.msra.mxu0 0.0
  %384 = vmatpush.msra.mxu0 0.0
  %385 = vmatpush.msra.mxu0 0.0
  %386 = vmatpush.msra.mxu0 %v370
  %387 = vmatpush.msra.mxu0 %v100
  %388 = vmatpush.msra.mxu0 %v97
  %389 = vmatpush.msra.mxu0 %v94
  %390 = vmatpush.msra.mxu0 %v91
  %391 = vmatpush.msra.mxu0 %v88
  %392 = vmatpush.msra.mxu0 %v85
  %393 = vmatpush.msra.mxu0 %v82
  %394 = vmatmul.f32.gmra.mxu0 %v228
  %v395 = vpop.f32.mrf.mxu0
  %v396 = vadd.f32 0.0, %v395
  %397 = vdwg.mxu0
  %398 = vmatpush.msra.mxu0 0.0
  %399 = vmatpush.msra.mxu0 0.0
  %400 = vmatpush.msra.mxu0 0.0
  %401 = vmatpush.msra.mxu0 0.0
  %402 = vmatpush.msra.mxu0 0.0
  %403 = vmatpush.msra.mxu0 0.0
  %404 = vmatpush.msra.mxu0 0.0
  %405 = vmatpush.msra.mxu0 0.0
  %406 = vmatpush.msra.mxu0 %v373
  %407 = vmatpush.msra.mxu0 %v101
  %408 = vmatpush.msra.mxu0 %v98
  %409 = vmatpush.msra.mxu0 %v95
  %410 = vmatpush.msra.mxu0 %v92
  %411 = vmatpush.msra.mxu0 %v89
  %412 = vmatpush.msra.mxu0 %v86
  %413 = vmatpush.msra.mxu0 %v83
  %414 = vmatmul.f32.gmra.mxu0 %v228
  %v415 = vpop.f32.mrf.mxu0
  %v416 = vadd.f32 0.0, %v415
  %417 = vdwg.mxu0
  %418 = vmatpush.msra.mxu0 0.0
  %419 = vmatpush.msra.mxu0 0.0
  %420 = vmatpush.msra.mxu0 0.0
  %421 = vmatpush.msra.mxu0 0.0
  %422 = vmatpush.msra.mxu0 0.0
  %423 = vmatpush.msra.mxu0 0.0
  %424 = vmatpush.msra.mxu0 0.0
  %425 = vmatpush.msra.mxu0 0.0
  %426 = vmatpush.msra.mxu0 %v376
  %427 = vmatpush.msra.mxu0 %v102
  %428 = vmatpush.msra.mxu0 %v99
  %429 = vmatpush.msra.mxu0 %v96
  %430 = vmatpush.msra.mxu0 %v93
  %431 = vmatpush.msra.mxu0 %v90
  %432 = vmatpush.msra.mxu0 %v87
  %433 = vmatpush.msra.mxu0 %v84
  %434 = vmatmul.f32.gmra.mxu0 %v228
  %v435 = vpop.f32.mrf.mxu0
  %v436 = vadd.f32 0.0, %v435
  %437 = vdwg.mxu0
  %v439 = vsel %vm230, %v127, 0
  %v442 = vsel %vm230, %v128, 0
  %v445 = vsel %vm230, %v129, 0
  %447 = vmatpush.msra.mxu0 0.0
  %448 = vmatpush.msra.mxu0 0.0
  %449 = vmatpush.msra.mxu0 0.0
  %450 = vmatpush.msra.mxu0 0.0
  %451 = vmatpush.msra.mxu0 0.0
  %452 = vmatpush.msra.mxu0 0.0
  %453 = vmatpush.msra.mxu0 0.0
  %454 = vmatpush.msra.mxu0 0.0
  %455 = vmatpush.msra.mxu0 %v439
  %456 = vmatpush.msra.mxu0 %v124
  %457 = vmatpush.msra.mxu0 %v121
  %458 = vmatpush.msra.mxu0 %v118
  %459 = vmatpush.msra.mxu0 %v115
  %460 = vmatpush.msra.mxu0 %v112
  %461 = vmatpush.msra.mxu0 %v109
  %462 = vmatpush.msra.mxu0 %v106
  %463 = vmatmul.f32.gmra.mxu0 %v228
  %v464 = vpop.f32.mrf.mxu0
  %v465 = vadd.f32 0.0, %v464
  %466 = vdwg.mxu0
  %467 = vmatpush.msra.mxu0 0.0
  %468 = vmatpush.msra.mxu0 0.0
  %469 = vmatpush.msra.mxu0 0.0
  %470 = vmatpush.msra.mxu0 0.0
  %471 = vmatpush.msra.mxu0 0.0
  %472 = vmatpush.msra.mxu0 0.0
  %473 = vmatpush.msra.mxu0 0.0
  %474 = vmatpush.msra.mxu0 0.0
  %475 = vmatpush.msra.mxu0 %v442
  %476 = vmatpush.msra.mxu0 %v125
  %477 = vmatpush.msra.mxu0 %v122
  %478 = vmatpush.msra.mxu0 %v119
  %479 = vmatpush.msra.mxu0 %v116
  %480 = vmatpush.msra.mxu0 %v113
  %481 = vmatpush.msra.mxu0 %v110
  %482 = vmatpush.msra.mxu0 %v107
  %483 = vmatmul.f32.gmra.mxu0 %v228
  %v484 = vpop.f32.mrf.mxu0
  %v485 = vadd.f32 0.0, %v484
  %486 = vdwg.mxu0
  %487 = vmatpush.msra.mxu0 0.0
  %488 = vmatpush.msra.mxu0 0.0
  %489 = vmatpush.msra.mxu0 0.0
  %490 = vmatpush.msra.mxu0 0.0
  %491 = vmatpush.msra.mxu0 0.0
  %492 = vmatpush.msra.mxu0 0.0
  %493 = vmatpush.msra.mxu0 0.0
  %494 = vmatpush.msra.mxu0 0.0
  %495 = vmatpush.msra.mxu0 %v445
  %496 = vmatpush.msra.mxu0 %v126
  %497 = vmatpush.msra.mxu0 %v123
  %498 = vmatpush.msra.mxu0 %v120
  %499 = vmatpush.msra.mxu0 %v117
  %500 = vmatpush.msra.mxu0 %v114
  %501 = vmatpush.msra.mxu0 %v111
  %502 = vmatpush.msra.mxu0 %v108
  %503 = vmatmul.f32.gmra.mxu0 %v228
  %v504 = vpop.f32.mrf.mxu0
  %v505 = vadd.f32 0.0, %v504
  %506 = vdwg.mxu0
  %v508 = vsel %vm230, %v151, 0
  %v511 = vsel %vm230, %v152, 0
  %v514 = vsel %vm230, %v153, 0
  %516 = vmatpush.msra.mxu0 0.0
  %517 = vmatpush.msra.mxu0 0.0
  %518 = vmatpush.msra.mxu0 0.0
  %519 = vmatpush.msra.mxu0 0.0
  %520 = vmatpush.msra.mxu0 0.0
  %521 = vmatpush.msra.mxu0 0.0
  %522 = vmatpush.msra.mxu0 0.0
  %523 = vmatpush.msra.mxu0 0.0
  %524 = vmatpush.msra.mxu0 %v508
  %525 = vmatpush.msra.mxu0 %v148
  %526 = vmatpush.msra.mxu0 %v145
  %527 = vmatpush.msra.mxu0 %v142
  %528 = vmatpush.msra.mxu0 %v139
  %529 = vmatpush.msra.mxu0 %v136
  %530 = vmatpush.msra.mxu0 %v133
  %531 = vmatpush.msra.mxu0 %v130
  %532 = vmatmul.f32.gmra.mxu0 %v228
  %v533 = vpop.f32.mrf.mxu0
  %v534 = vadd.f32 0.0, %v533
  %535 = vdwg.mxu0
  %536 = vmatpush.msra.mxu0 0.0
  %537 = vmatpush.msra.mxu0 0.0
  %538 = vmatpush.msra.mxu0 0.0
  %539 = vmatpush.msra.mxu0 0.0
  %540 = vmatpush.msra.mxu0 0.0
  %541 = vmatpush.msra.mxu0 0.0
  %542 = vmatpush.msra.mxu0 0.0
  %543 = vmatpush.msra.mxu0 0.0
  %544 = vmatpush.msra.mxu0 %v511
  %545 = vmatpush.msra.mxu0 %v149
  %546 = vmatpush.msra.mxu0 %v146
  %547 = vmatpush.msra.mxu0 %v143
  %548 = vmatpush.msra.mxu0 %v140
  %549 = vmatpush.msra.mxu0 %v137
  %550 = vmatpush.msra.mxu0 %v134
  %551 = vmatpush.msra.mxu0 %v131
  %552 = vmatmul.f32.gmra.mxu0 %v228
  %v553 = vpop.f32.mrf.mxu0
  %v554 = vadd.f32 0.0, %v553
  %555 = vdwg.mxu0
  %556 = vmatpush.msra.mxu0 0.0
  %557 = vmatpush.msra.mxu0 0.0
  %558 = vmatpush.msra.mxu0 0.0
  %559 = vmatpush.msra.mxu0 0.0
  %560 = vmatpush.msra.mxu0 0.0
  %561 = vmatpush.msra.mxu0 0.0
  %562 = vmatpush.msra.mxu0 0.0
  %563 = vmatpush.msra.mxu0 0.0
  %564 = vmatpush.msra.mxu0 %v514
  %565 = vmatpush.msra.mxu0 %v150
  %566 = vmatpush.msra.mxu0 %v147
  %567 = vmatpush.msra.mxu0 %v144
  %568 = vmatpush.msra.mxu0 %v141
  %569 = vmatpush.msra.mxu0 %v138
  %570 = vmatpush.msra.mxu0 %v135
  %571 = vmatpush.msra.mxu0 %v132
  %572 = vmatmul.f32.gmra.mxu0 %v228
  %v573 = vpop.f32.mrf.mxu0
  %v574 = vadd.f32 0.0, %v573
  %575 = vdwg.mxu0
  %v577 = vsel %vm230, %v175, 0
  %v580 = vsel %vm230, %v176, 0
  %v583 = vsel %vm230, %v177, 0
  %585 = vmatpush.msra.mxu0 0.0
  %586 = vmatpush.msra.mxu0 0.0
  %587 = vmatpush.msra.mxu0 0.0
  %588 = vmatpush.msra.mxu0 0.0
  %589 = vmatpush.msra.mxu0 0.0
  %590 = vmatpush.msra.mxu0 0.0
  %591 = vmatpush.msra.mxu0 0.0
  %592 = vmatpush.msra.mxu0 0.0
  %593 = vmatpush.msra.mxu0 %v577
  %594 = vmatpush.msra.mxu0 %v172
  %595 = vmatpush.msra.mxu0 %v169
  %596 = vmatpush.msra.mxu0 %v166
  %597 = vmatpush.msra.mxu0 %v163
  %598 = vmatpush.msra.mxu0 %v160
  %599 = vmatpush.msra.mxu0 %v157
  %600 = vmatpush.msra.mxu0 %v154
  %601 = vmatmul.f32.gmra.mxu0 %v228
  %v602 = vpop.f32.mrf.mxu0
  %v603 = vadd.f32 0.0, %v602
  %604 = vdwg.mxu0
  %605 = vmatpush.msra.mxu0 0.0
  %606 = vmatpush.msra.mxu0 0.0
  %607 = vmatpush.msra.mxu0 0.0
  %608 = vmatpush.msra.mxu0 0.0
  %609 = vmatpush.msra.mxu0 0.0
  %610 = vmatpush.msra.mxu0 0.0
  %611 = vmatpush.msra.mxu0 0.0
  %612 = vmatpush.msra.mxu0 0.0
  %613 = vmatpush.msra.mxu0 %v580
  %614 = vmatpush.msra.mxu0 %v173
  %615 = vmatpush.msra.mxu0 %v170
  %616 = vmatpush.msra.mxu0 %v167
  %617 = vmatpush.msra.mxu0 %v164
  %618 = vmatpush.msra.mxu0 %v161
  %619 = vmatpush.msra.mxu0 %v158
  %620 = vmatpush.msra.mxu0 %v155
  %621 = vmatmul.f32.gmra.mxu0 %v228
  %v622 = vpop.f32.mrf.mxu0
  %v623 = vadd.f32 0.0, %v622
  %624 = vdwg.mxu0
  %625 = vmatpush.msra.mxu0 0.0
  %626 = vmatpush.msra.mxu0 0.0
  %627 = vmatpush.msra.mxu0 0.0
  %628 = vmatpush.msra.mxu0 0.0
  %629 = vmatpush.msra.mxu0 0.0
  %630 = vmatpush.msra.mxu0 0.0
  %631 = vmatpush.msra.mxu0 0.0
  %632 = vmatpush.msra.mxu0 0.0
  %633 = vmatpush.msra.mxu0 %v583
  %634 = vmatpush.msra.mxu0 %v174
  %635 = vmatpush.msra.mxu0 %v171
  %636 = vmatpush.msra.mxu0 %v168
  %637 = vmatpush.msra.mxu0 %v165
  %638 = vmatpush.msra.mxu0 %v162
  %639 = vmatpush.msra.mxu0 %v159
  %640 = vmatpush.msra.mxu0 %v156
  %641 = vmatmul.f32.gmra.mxu0 %v228
  %v642 = vpop.f32.mrf.mxu0
  %v643 = vadd.f32 0.0, %v642
  %644 = vdwg.mxu0
  %v646 = vsel %vm230, %v199, 0
  %v649 = vsel %vm230, %v200, 0
  %v652 = vsel %vm230, %v201, 0
  %654 = vmatpush.msra.mxu0 0.0
  %655 = vmatpush.msra.mxu0 0.0
  %656 = vmatpush.msra.mxu0 0.0
  %657 = vmatpush.msra.mxu0 0.0
  %658 = vmatpush.msra.mxu0 0.0
  %659 = vmatpush.msra.mxu0 0.0
  %660 = vmatpush.msra.mxu0 0.0
  %661 = vmatpush.msra.mxu0 0.0
  %662 = vmatpush.msra.mxu0 %v646
  %663 = vmatpush.msra.mxu0 %v196
  %664 = vmatpush.msra.mxu0 %v193
  %665 = vmatpush.msra.mxu0 %v190
  %666 = vmatpush.msra.mxu0 %v187
  %667 = vmatpush.msra.mxu0 %v184
  %668 = vmatpush.msra.mxu0 %v181
  %669 = vmatpush.msra.mxu0 %v178
  %670 = vmatmul.f32.gmra.mxu0 %v228
  %v671 = vpop.f32.mrf.mxu0
  %v672 = vadd.f32 0.0, %v671
  %673 = vdwg.mxu0
  %674 = vmatpush.msra.mxu0 0.0
  %675 = vmatpush.msra.mxu0 0.0
  %676 = vmatpush.msra.mxu0 0.0
  %677 = vmatpush.msra.mxu0 0.0
  %678 = vmatpush.msra.mxu0 0.0
  %679 = vmatpush.msra.mxu0 0.0
  %680 = vmatpush.msra.mxu0 0.0
  %681 = vmatpush.msra.mxu0 0.0
  %682 = vmatpush.msra.mxu0 %v649
  %683 = vmatpush.msra.mxu0 %v197
  %684 = vmatpush.msra.mxu0 %v194
  %685 = vmatpush.msra.mxu0 %v191
  %686 = vmatpush.msra.mxu0 %v188
  %687 = vmatpush.msra.mxu0 %v185
  %688 = vmatpush.msra.mxu0 %v182
  %689 = vmatpush.msra.mxu0 %v179
  %690 = vmatmul.f32.gmra.mxu0 %v228
  %v691 = vpop.f32.mrf.mxu0
  %v692 = vadd.f32 0.0, %v691
  %693 = vdwg.mxu0
  %694 = vmatpush.msra.mxu0 0.0
  %695 = vmatpush.msra.mxu0 0.0
  %696 = vmatpush.msra.mxu0 0.0
  %697 = vmatpush.msra.mxu0 0.0
  %698 = vmatpush.msra.mxu0 0.0
  %699 = vmatpush.msra.mxu0 0.0
  %700 = vmatpush.msra.mxu0 0.0
  %701 = vmatpush.msra.mxu0 0.0
  %702 = vmatpush.msra.mxu0 %v652
  %703 = vmatpush.msra.mxu0 %v198
  %704 = vmatpush.msra.mxu0 %v195
  %705 = vmatpush.msra.mxu0 %v192
  %706 = vmatpush.msra.mxu0 %v189
  %707 = vmatpush.msra.mxu0 %v186
  %708 = vmatpush.msra.mxu0 %v183
  %709 = vmatpush.msra.mxu0 %v180
  %710 = vmatmul.f32.gmra.mxu0 %v228
  %v711 = vpop.f32.mrf.mxu0
  %v712 = vadd.f32 0.0, %v711
  %713 = vdwg.mxu0
  %v715 = vsel %vm230, %v223, 0
  %v718 = vsel %vm230, %v224, 0
  %v721 = vsel %vm230, %v225, 0
  %723 = vmatpush.msra.mxu0 0.0
  %724 = vmatpush.msra.mxu0 0.0
  %725 = vmatpush.msra.mxu0 0.0
  %726 = vmatpush.msra.mxu0 0.0
  %727 = vmatpush.msra.mxu0 0.0
  %728 = vmatpush.msra.mxu0 0.0
  %729 = vmatpush.msra.mxu0 0.0
  %730 = vmatpush.msra.mxu0 0.0
  %731 = vmatpush.msra.mxu0 %v715
  %732 = vmatpush.msra.mxu0 %v220
  %733 = vmatpush.msra.mxu0 %v217
  %734 = vmatpush.msra.mxu0 %v214
  %735 = vmatpush.msra.mxu0 %v211
  %736 = vmatpush.msra.mxu0 %v208
  %737 = vmatpush.msra.mxu0 %v205
  %738 = vmatpush.msra.mxu0 %v202
  %739 = vmatmul.f32.gmra.mxu0 %v228
  %v740 = vpop.f32.mrf.mxu0
  %v741 = vadd.f32 0.0, %v740
  %742 = vdwg.mxu0
  %743 = vmatpush.msra.mxu0 0.0
  %744 = vmatpush.msra.mxu0 0.0
  %745 = vmatpush.msra.mxu0 0.0
  %746 = vmatpush.msra.mxu0 0.0
  %747 = vmatpush.msra.mxu0 0.0
  %748 = vmatpush.msra.mxu0 0.0
  %749 = vmatpush.msra.mxu0 0.0
  %750 = vmatpush.msra.mxu0 0.0
  %751 = vmatpush.msra.mxu0 %v718
  %752 = vmatpush.msra.mxu0 %v221
  %753 = vmatpush.msra.mxu0 %v218
  %754 = vmatpush.msra.mxu0 %v215
  %755 = vmatpush.msra.mxu0 %v212
  %756 = vmatpush.msra.mxu0 %v209
  %757 = vmatpush.msra.mxu0 %v206
  %758 = vmatpush.msra.mxu0 %v203
  %759 = vmatmul.f32.gmra.mxu0 %v228
  %v760 = vpop.f32.mrf.mxu0
  %v761 = vadd.f32 0.0, %v760
  %762 = vdwg.mxu0
  %763 = vmatpush.msra.mxu0 0.0
  %764 = vmatpush.msra.mxu0 0.0
  %765 = vmatpush.msra.mxu0 0.0
  %766 = vmatpush.msra.mxu0 0.0
  %767 = vmatpush.msra.mxu0 0.0
  %768 = vmatpush.msra.mxu0 0.0
  %769 = vmatpush.msra.mxu0 0.0
  %770 = vmatpush.msra.mxu0 0.0
  %771 = vmatpush.msra.mxu0 %v721
  %772 = vmatpush.msra.mxu0 %v222
  %773 = vmatpush.msra.mxu0 %v219
  %774 = vmatpush.msra.mxu0 %v216
  %775 = vmatpush.msra.mxu0 %v213
  %776 = vmatpush.msra.mxu0 %v210
  %777 = vmatpush.msra.mxu0 %v207
  %778 = vmatpush.msra.mxu0 %v204
  %779 = vmatmul.f32.gmra.mxu0 %v228
  %v780 = vpop.f32.mrf.mxu0
  %v781 = vadd.f32 0.0, %v780
  %782 = vdwg.mxu0
  %v783 = vld [vmem:[%s4] sm:$0x7]
  %v784 = vld [vmem:[%s2] sm:$0xff]
  %v785 = vld [vmem:[%s2 + $0x8] sm:$0xff]
  %v786 = vld [vmem:[%s2 + $0x10] sm:$0xff]
  %v787 = vld [vmem:[%s2 + $0x18] sm:$0xff]
  %v788 = vld [vmem:[%s2 + $0x20] sm:$0xff]
  %v789 = vld [vmem:[%s2 + $0x28] sm:$0xff]
  %v790 = vld [vmem:[%s2 + $0x30] sm:$0xff]
  %v791 = vld [vmem:[%s2 + $0x38] sm:$0x3f]
  %v792 = vld [vmem:[%s2 + $0x40] sm:$0xff]
  %v793 = vld [vmem:[%s2 + $0x48] sm:$0xff]
  %v794 = vld [vmem:[%s2 + $0x50] sm:$0xff]
  %v795 = vld [vmem:[%s2 + $0x58] sm:$0xff]
  %v796 = vld [vmem:[%s2 + $0x60] sm:$0xff]
  %v797 = vld [vmem:[%s2 + $0x68] sm:$0xff]
  %v798 = vld [vmem:[%s2 + $0x70] sm:$0xff]
  %v799 = vld [vmem:[%s2 + $0x78] sm:$0x3f]
  %v800 = vld [vmem:[%s2 + $0x80] sm:$0xff]
  %v801 = vld [vmem:[%s2 + $0x88] sm:$0xff]
  %v802 = vld [vmem:[%s2 + $0x90] sm:$0xff]
  %v803 = vld [vmem:[%s2 + $0x98] sm:$0xff]
  %v804 = vld [vmem:[%s2 + $0xa0] sm:$0xff]
  %v805 = vld [vmem:[%s2 + $0xa8] sm:$0xff]
  %v806 = vld [vmem:[%s2 + $0xb0] sm:$0xff]
  %v807 = vld [vmem:[%s2 + $0xb8] sm:$0x3f]
  %v808 = vld [vmem:[%s2 + $0xc0] sm:$0xff]
  %v809 = vld [vmem:[%s2 + $0xc8] sm:$0xff]
  %v810 = vld [vmem:[%s2 + $0xd0] sm:$0xff]
  %v811 = vld [vmem:[%s2 + $0xd8] sm:$0xff]
  %v812 = vld [vmem:[%s2 + $0xe0] sm:$0xff]
  %v813 = vld [vmem:[%s2 + $0xe8] sm:$0xff]
  %v814 = vld [vmem:[%s2 + $0xf0] sm:$0xff]
  %v815 = vld [vmem:[%s2 + $0xf8] sm:$0x3f]
  %v816 = vld [vmem:[%s2 + $0x100] sm:$0xff]
  %v817 = vld [vmem:[%s2 + $0x108] sm:$0xff]
  %v818 = vld [vmem:[%s2 + $0x110] sm:$0xff]
  %v819 = vld [vmem:[%s2 + $0x118] sm:$0xff]
  %v820 = vld [vmem:[%s2 + $0x120] sm:$0xff]
  %v821 = vld [vmem:[%s2 + $0x128] sm:$0xff]
  %v822 = vld [vmem:[%s2 + $0x130] sm:$0xff]
  %v823 = vld [vmem:[%s2 + $0x138] sm:$0x3f]
  %v824 = vld [vmem:[%s2 + $0x140] sm:$0xff]
  %v825 = vld [vmem:[%s2 + $0x148] sm:$0xff]
  %v826 = vld [vmem:[%s2 + $0x150] sm:$0xff]
  %v827 = vld [vmem:[%s2 + $0x158] sm:$0xff]
  %v828 = vld [vmem:[%s2 + $0x160] sm:$0xff]
  %v829 = vld [vmem:[%s2 + $0x168] sm:$0xff]
  %v830 = vld [vmem:[%s2 + $0x170] sm:$0xff]
  %v831 = vld [vmem:[%s2 + $0x178] sm:$0x3f]
  %v832 = vld [vmem:[%s2 + $0x180] sm:$0xff]
  %v833 = vld [vmem:[%s2 + $0x188] sm:$0xff]
  %v834 = vld [vmem:[%s2 + $0x190] sm:$0xff]
  %v835 = vld [vmem:[%s2 + $0x198] sm:$0xff]
  %v836 = vld [vmem:[%s2 + $0x1a0] sm:$0xff]
  %v837 = vld [vmem:[%s2 + $0x1a8] sm:$0xff]
  %v838 = vld [vmem:[%s2 + $0x1b0] sm:$0xff]
  %v839 = vld [vmem:[%s2 + $0x1b8] sm:$0x3f]
  %v840 = vld [vmem:[%s2 + $0x1c0] sm:$0xff]
  %v841 = vld [vmem:[%s2 + $0x1c8] sm:$0xff]
  %v842 = vld [vmem:[%s2 + $0x1d0] sm:$0xff]
  %v843 = vld [vmem:[%s2 + $0x1d8] sm:$0xff]
  %v844 = vld [vmem:[%s2 + $0x1e0] sm:$0xff]
  %v845 = vld [vmem:[%s2 + $0x1e8] sm:$0xff]
  %v846 = vld [vmem:[%s2 + $0x1f0] sm:$0xff]
  %v847 = vld [vmem:[%s2 + $0x1f8] sm:$0x3f]
  %v849 = vsel %vm226, %v783, 0
  %v852 = vsel %vm230, %v791, 0
  %854 = vmatpush.msra.mxu0 0.0
  %855 = vmatpush.msra.mxu0 0.0
  %856 = vmatpush.msra.mxu0 0.0
  %857 = vmatpush.msra.mxu0 0.0
  %858 = vmatpush.msra.mxu0 0.0
  %859 = vmatpush.msra.mxu0 0.0
  %860 = vmatpush.msra.mxu0 0.0
  %861 = vmatpush.msra.mxu0 0.0
  %862 = vmatpush.msra.mxu0 %v852
  %863 = vmatpush.msra.mxu0 %v790
  %864 = vmatpush.msra.mxu0 %v789
  %865 = vmatpush.msra.mxu0 %v788
  %866 = vmatpush.msra.mxu0 %v787
  %867 = vmatpush.msra.mxu0 %v786
  %868 = vmatpush.msra.mxu0 %v785
  %869 = vmatpush.msra.mxu0 %v784
  %870 = vmatmul.f32.gmra.mxu0 %v849
  %v871 = vpop.f32.mrf.mxu0
  %v872 = vadd.f32 0.0, %v871
  %873 = vdwg.mxu0
  %v875 = vsel %vm230, %v799, 0
  %877 = vmatpush.msra.mxu0 0.0
  %878 = vmatpush.msra.mxu0 0.0
  %879 = vmatpush.msra.mxu0 0.0
  %880 = vmatpush.msra.mxu0 0.0
  %881 = vmatpush.msra.mxu0 0.0
  %882 = vmatpush.msra.mxu0 0.0
  %883 = vmatpush.msra.mxu0 0.0
  %884 = vmatpush.msra.mxu0 0.0
  %885 = vmatpush.msra.mxu0 %v875
  %886 = vmatpush.msra.mxu0 %v798
  %887 = vmatpush.msra.mxu0 %v797
  %888 = vmatpush.msra.mxu0 %v796
  %889 = vmatpush.msra.mxu0 %v795
  %890 = vmatpush.msra.mxu0 %v794
  %891 = vmatpush.msra.mxu0 %v793
  %892 = vmatpush.msra.mxu0 %v792
  %893 = vmatmul.f32.gmra.mxu0 %v849
  %v894 = vpop.f32.mrf.mxu0
  %v895 = vadd.f32 0.0, %v894
  %896 = vdwg.mxu0
  %v898 = vsel %vm230, %v807, 0
  %900 = vmatpush.msra.mxu0 0.0
  %901 = vmatpush.msra.mxu0 0.0
  %902 = vmatpush.msra.mxu0 0.0
  %903 = vmatpush.msra.mxu0 0.0
  %904 = vmatpush.msra.mxu0 0.0
  %905 = vmatpush.msra.mxu0 0.0
  %906 = vmatpush.msra.mxu0 0.0
  %907 = vmatpush.msra.mxu0 0.0
  %908 = vmatpush.msra.mxu0 %v898
  %909 = vmatpush.msra.mxu0 %v806
  %910 = vmatpush.msra.mxu0 %v805
  %911 = vmatpush.msra.mxu0 %v804
  %912 = vmatpush.msra.mxu0 %v803
  %913 = vmatpush.msra.mxu0 %v802
  %914 = vmatpush.msra.mxu0 %v801
  %915 = vmatpush.msra.mxu0 %v800
  %916 = vmatmul.f32.gmra.mxu0 %v849
  %v917 = vpop.f32.mrf.mxu0
  %v918 = vadd.f32 0.0, %v917
  %919 = vdwg.mxu0
  %v921 = vsel %vm230, %v815, 0
  %923 = vmatpush.msra.mxu0 0.0
  %924 = vmatpush.msra.mxu0 0.0
  %925 = vmatpush.msra.mxu0 0.0
  %926 = vmatpush.msra.mxu0 0.0
  %927 = vmatpush.msra.mxu0 0.0
  %928 = vmatpush.msra.mxu0 0.0
  %929 = vmatpush.msra.mxu0 0.0
  %930 = vmatpush.msra.mxu0 0.0
  %931 = vmatpush.msra.mxu0 %v921
  %932 = vmatpush.msra.mxu0 %v814
  %933 = vmatpush.msra.mxu0 %v813
  %934 = vmatpush.msra.mxu0 %v812
  %935 = vmatpush.msra.mxu0 %v811
  %936 = vmatpush.msra.mxu0 %v810
  %937 = vmatpush.msra.mxu0 %v809
  %938 = vmatpush.msra.mxu0 %v808
  %939 = vmatmul.f32.gmra.mxu0 %v849
  %v940 = vpop.f32.mrf.mxu0
  %v941 = vadd.f32 0.0, %v940
  %942 = vdwg.mxu0
  %v944 = vsel %vm230, %v823, 0
  %946 = vmatpush.msra.mxu0 0.0
  %947 = vmatpush.msra.mxu0 0.0
  %948 = vmatpush.msra.mxu0 0.0
  %949 = vmatpush.msra.mxu0 0.0
  %950 = vmatpush.msra.mxu0 0.0
  %951 = vmatpush.msra.mxu0 0.0
  %952 = vmatpush.msra.mxu0 0.0
  %953 = vmatpush.msra.mxu0 0.0
  %954 = vmatpush.msra.mxu0 %v944
  %955 = vmatpush.msra.mxu0 %v822
  %956 = vmatpush.msra.mxu0 %v821
  %957 = vmatpush.msra.mxu0 %v820
  %958 = vmatpush.msra.mxu0 %v819
  %959 = vmatpush.msra.mxu0 %v818
  %960 = vmatpush.msra.mxu0 %v817
  %961 = vmatpush.msra.mxu0 %v816
  %962 = vmatmul.f32.gmra.mxu0 %v849
  %v963 = vpop.f32.mrf.mxu0
  %v964 = vadd.f32 0.0, %v963
  %965 = vdwg.mxu0
  %v967 = vsel %vm230, %v831, 0
  %969 = vmatpush.msra.mxu0 0.0
  %970 = vmatpush.msra.mxu0 0.0
  %971 = vmatpush.msra.mxu0 0.0
  %972 = vmatpush.msra.mxu0 0.0
  %973 = vmatpush.msra.mxu0 0.0
  %974 = vmatpush.msra.mxu0 0.0
  %975 = vmatpush.msra.mxu0 0.0
  %976 = vmatpush.msra.mxu0 0.0
  %977 = vmatpush.msra.mxu0 %v967
  %978 = vmatpush.msra.mxu0 %v830
  %979 = vmatpush.msra.mxu0 %v829
  %980 = vmatpush.msra.mxu0 %v828
  %981 = vmatpush.msra.mxu0 %v827
  %982 = vmatpush.msra.mxu0 %v826
  %983 = vmatpush.msra.mxu0 %v825
  %984 = vmatpush.msra.mxu0 %v824
  %985 = vmatmul.f32.gmra.mxu0 %v849
  %v986 = vpop.f32.mrf.mxu0
  %v987 = vadd.f32 0.0, %v986
  %988 = vdwg.mxu0
  %v990 = vsel %vm230, %v839, 0
  %992 = vmatpush.msra.mxu0 0.0
  %993 = vmatpush.msra.mxu0 0.0
  %994 = vmatpush.msra.mxu0 0.0
  %995 = vmatpush.msra.mxu0 0.0
  %996 = vmatpush.msra.mxu0 0.0
  %997 = vmatpush.msra.mxu0 0.0
  %998 = vmatpush.msra.mxu0 0.0
  %999 = vmatpush.msra.mxu0 0.0
  %1000 = vmatpush.msra.mxu0 %v990
  %1001 = vmatpush.msra.mxu0 %v838
  %1002 = vmatpush.msra.mxu0 %v837
  %1003 = vmatpush.msra.mxu0 %v836
  %1004 = vmatpush.msra.mxu0 %v835
  %1005 = vmatpush.msra.mxu0 %v834
  %1006 = vmatpush.msra.mxu0 %v833
  %1007 = vmatpush.msra.mxu0 %v832
  %1008 = vmatmul.f32.gmra.mxu0 %v849
  %v1009 = vpop.f32.mrf.mxu0
  %v1010 = vadd.f32 0.0, %v1009
  %1011 = vdwg.mxu0
  %v1013 = vsel %vm230, %v847, 0
  %1015 = vmatpush.msra.mxu0 0.0
  %1016 = vmatpush.msra.mxu0 0.0
  %1017 = vmatpush.msra.mxu0 0.0
  %1018 = vmatpush.msra.mxu0 0.0
  %1019 = vmatpush.msra.mxu0 0.0
  %1020 = vmatpush.msra.mxu0 0.0
  %1021 = vmatpush.msra.mxu0 0.0
  %1022 = vmatpush.msra.mxu0 0.0
  %1023 = vmatpush.msra.mxu0 %v1013
  %1024 = vmatpush.msra.mxu0 %v846
  %1025 = vmatpush.msra.mxu0 %v845
  %1026 = vmatpush.msra.mxu0 %v844
  %1027 = vmatpush.msra.mxu0 %v843
  %1028 = vmatpush.msra.mxu0 %v842
  %1029 = vmatpush.msra.mxu0 %v841
  %1030 = vmatpush.msra.mxu0 %v840
  %1031 = vmatmul.f32.gmra.mxu0 %v849
  %v1032 = vpop.f32.mrf.mxu0
  %v1033 = vadd.f32 0.0, %v1032
  %1034 = vdwg.mxu0
  %v1035 = vld [vmem:[%s7] sm:$0x1]
  %v1037 = vperm.slane %v1035, 0
  %v1039 = vld [vmem:[%s5] sm:$0xff]
  %v1040 = vld [vmem:[%s5 + $0x8] sm:$0xff]
  %v1041 = vld [vmem:[%s5 + $0x10] sm:$0xff]
  %v1042 = vld [vmem:[%s5 + $0x18] sm:$0xff]
  %v1043 = vld [vmem:[%s5 + $0x20] sm:$0xff]
  %v1044 = vld [vmem:[%s5 + $0x28] sm:$0xff]
  %v1045 = vld [vmem:[%s5 + $0x30] sm:$0xff]
  %v1046 = vld [vmem:[%s5 + $0x38] sm:$0xff]
  %v1047 = vld [vmem:[%s5 + $0x40] sm:$0xff]
  %v1048 = vld [vmem:[%s5 + $0x48] sm:$0xff]
  %v1049 = vld [vmem:[%s5 + $0x50] sm:$0xff]
  %v1050 = vld [vmem:[%s5 + $0x58] sm:$0xff]
  %v1051 = vld [vmem:[%s5 + $0x60] sm:$0xff]
  %v1052 = vld [vmem:[%s5 + $0x68] sm:$0xff]
  %v1053 = vld [vmem:[%s5 + $0x70] sm:$0xff]
  %v1054 = vld [vmem:[%s5 + $0x78] sm:$0xff]
  %v1055 = vld [vmem:[%s5 + $0x80] sm:$0xff]
  %v1056 = vld [vmem:[%s5 + $0x88] sm:$0xff]
  %v1057 = vld [vmem:[%s5 + $0x90] sm:$0xff]
  %v1058 = vld [vmem:[%s5 + $0x98] sm:$0xff]
  %v1059 = vld [vmem:[%s5 + $0xa0] sm:$0xff]
  %v1060 = vld [vmem:[%s5 + $0xa8] sm:$0xff]
  %v1061 = vld [vmem:[%s5 + $0xb0] sm:$0xff]
  %v1062 = vld [vmem:[%s5 + $0xb8] sm:$0xff]
  %v1063 = vld [vmem:[%s5 + $0xc0] sm:$0xff]
  %v1064 = vld [vmem:[%s5 + $0xc8] sm:$0xff]
  %v1065 = vld [vmem:[%s5 + $0xd0] sm:$0xff]
  %v1066 = vld [vmem:[%s5 + $0xd8] sm:$0xff]
  %v1067 = vld [vmem:[%s5 + $0xe0] sm:$0xff]
  %v1068 = vld [vmem:[%s5 + $0xe8] sm:$0xff]
  %v1069 = vld [vmem:[%s5 + $0xf0] sm:$0xff]
  %v1070 = vld [vmem:[%s5 + $0xf8] sm:$0xff]
  %v1071 = vld [vmem:[%s5 + $0x100] sm:$0xff]
  %v1072 = vld [vmem:[%s5 + $0x108] sm:$0xff]
  %v1073 = vld [vmem:[%s5 + $0x110] sm:$0xff]
  %v1074 = vld [vmem:[%s5 + $0x118] sm:$0xff]
  %v1075 = vld [vmem:[%s5 + $0x120] sm:$0xff]
  %v1076 = vld [vmem:[%s5 + $0x128] sm:$0xff]
  %v1077 = vld [vmem:[%s5 + $0x130] sm:$0xff]
  %v1078 = vld [vmem:[%s5 + $0x138] sm:$0xff]
  %v1079 = vld [vmem:[%s5 + $0x140] sm:$0xff]
  %v1080 = vld [vmem:[%s5 + $0x148] sm:$0xff]
  %v1081 = vld [vmem:[%s5 + $0x150] sm:$0xff]
  %v1082 = vld [vmem:[%s5 + $0x158] sm:$0xff]
  %v1083 = vld [vmem:[%s5 + $0x160] sm:$0xff]
  %v1084 = vld [vmem:[%s5 + $0x168] sm:$0xff]
  %v1085 = vld [vmem:[%s5 + $0x170] sm:$0xff]
  %v1110 = vrot.slane %v327, 7
  %vm1111 = vcmask 1041409
  %v1112 = vsel %vm1111, %v1110, %v258
  %v1113 = vrot.slane %v396, 6
  %vm1114 = vcmask 1042434
  %v1115 = vsel %vm1114, %v1113, %v1112
  %v1116 = vrot.slane %v465, 5
  %vm1117 = vcmask 1043459
  %v1118 = vsel %vm1117, %v1116, %v1115
  %v1119 = vrot.slane %v534, 4
  %vm1120 = vcmask 1044484
  %v1121 = vsel %vm1120, %v1119, %v1118
  %v1122 = vrot.slane %v603, 3
  %vm1123 = vcmask 1045509
  %v1124 = vsel %vm1123, %v1122, %v1121
  %v1125 = vrot.slane %v672, 2
  %vm1126 = vcmask 1046534
  %v1127 = vsel %vm1126, %v1125, %v1124
  %v1128 = vrot.slane %v741, 1
  %vm1129 = vcmask 1047559
  %v1130 = vsel %vm1129, %v1128, %v1127
  %v1131 = vrot.slane %v347, 7
  %v1132 = vsel %vm1111, %v1131, %v278
  %v1133 = vrot.slane %v416, 6
  %v1134 = vsel %vm1114, %v1133, %v1132
  %v1135 = vrot.slane %v485, 5
  %v1136 = vsel %vm1117, %v1135, %v1134
  %v1137 = vrot.slane %v554, 4
  %v1138 = vsel %vm1120, %v1137, %v1136
  %v1139 = vrot.slane %v623, 3
  %v1140 = vsel %vm1123, %v1139, %v1138
  %v1141 = vrot.slane %v692, 2
  %v1142 = vsel %vm1126, %v1141, %v1140
  %v1143 = vrot.slane %v761, 1
  %v1144 = vsel %vm1129, %v1143, %v1142
  %v1145 = vrot.slane %v367, 7
  %v1146 = vsel %vm1111, %v1145, %v298
  %v1147 = vrot.slane %v436, 6
  %v1148 = vsel %vm1114, %v1147, %v1146
  %v1149 = vrot.slane %v505, 5
  %v1150 = vsel %vm1117, %v1149, %v1148
  %v1151 = vrot.slane %v574, 4
  %v1152 = vsel %vm1120, %v1151, %v1150
  %v1153 = vrot.slane %v643, 3
  %v1154 = vsel %vm1123, %v1153, %v1152
  %v1155 = vrot.slane %v712, 2
  %v1156 = vsel %vm1126, %v1155, %v1154
  %v1157 = vrot.slane %v781, 1
  %v1158 = vsel %vm1129, %v1157, %v1156
  %vm1161 = vcmask 982016
  %v1162 = vsel %vm1161, %v1158, 0
  %1164 = vmatpush.msra.mxu0 %v1054
  %1165 = vmatpush.msra.mxu0 %v1053
  %1166 = vmatpush.msra.mxu0 %v1052
  %1167 = vmatpush.msra.mxu0 %v1051
  %1168 = vmatpush.msra.mxu0 %v1050
  %1169 = vmatpush.msra.mxu0 %v1049
  %1170 = vmatpush.msra.mxu0 %v1048
  %1171 = vmatpush.msra.mxu0 %v1047
  %1172 = vmatpush.msra.mxu0 %v1046
  %1173 = vmatpush.msra.mxu0 %v1045
  %1174 = vmatpush.msra.mxu0 %v1044
  %1175 = vmatpush.msra.mxu0 %v1043
  %1176 = vmatpush.msra.mxu0 %v1042
  %1177 = vmatpush.msra.mxu0 %v1041
  %1178 = vmatpush.msra.mxu0 %v1040
  %1179 = vmatpush.msra.mxu0 %v1039
  %1180 = vmatmul.f32.gmra.mxu0 %v1130
  %v1181 = vpop.f32.mrf.mxu0
  %v1182 = vadd.f32 0.0, %v1181
  %1183 = vdwg.mxu0
  %1184 = vmatpush.msra.mxu0 %v1070
  %1185 = vmatpush.msra.mxu0 %v1069
  %1186 = vmatpush.msra.mxu0 %v1068
  %1187 = vmatpush.msra.mxu0 %v1067
  %1188 = vmatpush.msra.mxu0 %v1066
  %1189 = vmatpush.msra.mxu0 %v1065
  %1190 = vmatpush.msra.mxu0 %v1064
  %1191 = vmatpush.msra.mxu0 %v1063
  %1192 = vmatpush.msra.mxu0 %v1062
  %1193 = vmatpush.msra.mxu0 %v1061
  %1194 = vmatpush.msra.mxu0 %v1060
  %1195 = vmatpush.msra.mxu0 %v1059
  %1196 = vmatpush.msra.mxu0 %v1058
  %1197 = vmatpush.msra.mxu0 %v1057
  %1198 = vmatpush.msra.mxu0 %v1056
  %1199 = vmatpush.msra.mxu0 %v1055
  %1200 = vmatmul.f32.gmra.mxu0 %v1144
  %v1201 = vpop.f32.mrf.mxu0
  %v1202 = vadd.f32 %v1182, %v1201
  %1203 = vdwg.mxu0
  %1204 = vmatpush.msra.mxu0 0.0
  %1205 = vmatpush.msra.mxu0 %v1085
  %1206 = vmatpush.msra.mxu0 %v1084
  %1207 = vmatpush.msra.mxu0 %v1083
  %1208 = vmatpush.msra.mxu0 %v1082
  %1209 = vmatpush.msra.mxu0 %v1081
  %1210 = vmatpush.msra.mxu0 %v1080
  %1211 = vmatpush.msra.mxu0 %v1079
  %1212 = vmatpush.msra.mxu0 %v1078
  %1213 = vmatpush.msra.mxu0 %v1077
  %1214 = vmatpush.msra.mxu0 %v1076
  %1215 = vmatpush.msra.mxu0 %v1075
  %1216 = vmatpush.msra.mxu0 %v1074
  %1217 = vmatpush.msra.mxu0 %v1073
  %1218 = vmatpush.msra.mxu0 %v1072
  %1219 = vmatpush.msra.mxu0 %v1071
  %1220 = vmatmul.f32.gmra.mxu0 %v1162
  %v1221 = vpop.f32.mrf.mxu0
  %v1222 = vadd.f32 %v1202, %v1221
  %1223 = vdwg.mxu0
  %v1224 = vadd.f32 %v1037, %v1222
  %v1225 = vld [vmem:[%s6] sm:$0xff]
  %v1226 = vld [vmem:[%s6 + $0x8] sm:$0xff]
  %v1227 = vld [vmem:[%s6 + $0x10] sm:$0xff]
  %v1228 = vld [vmem:[%s6 + $0x18] sm:$0xff]
  %v1229 = vld [vmem:[%s6 + $0x20] sm:$0xff]
  %v1230 = vld [vmem:[%s6 + $0x28] sm:$0xff]
  %v1231 = vld [vmem:[%s6 + $0x30] sm:$0xff]
  %v1232 = vld [vmem:[%s6 + $0x38] sm:$0xff]
  %v1233 = vld [vmem:[%s6 + $0x40] sm:$0xff]
  %v1234 = vld [vmem:[%s6 + $0x48] sm:$0xf]
  %v1243 = vrot.slane %v895, 7
  %v1244 = vsel %vm1111, %v1243, %v872
  %v1245 = vrot.slane %v918, 6
  %v1246 = vsel %vm1114, %v1245, %v1244
  %v1247 = vrot.slane %v941, 5
  %v1248 = vsel %vm1117, %v1247, %v1246
  %v1249 = vrot.slane %v964, 4
  %v1250 = vsel %vm1120, %v1249, %v1248
  %v1251 = vrot.slane %v987, 3
  %v1252 = vsel %vm1123, %v1251, %v1250
  %v1253 = vrot.slane %v1010, 2
  %v1254 = vsel %vm1126, %v1253, %v1252
  %v1255 = vrot.slane %v1033, 1
  %v1256 = vsel %vm1129, %v1255, %v1254
  %vm1257 = vcmask 621568
  %v1258 = vsel %vm1257, %v1256, 0
  %vm1260 = vcmask 1043456
  %v1262 = vsel %vm1260, %v1234, 0
  %1264 = vmatpush.msra.mxu0 0.0
  %1265 = vmatpush.msra.mxu0 0.0
  %1266 = vmatpush.msra.mxu0 0.0
  %1267 = vmatpush.msra.mxu0 0.0
  %1268 = vmatpush.msra.mxu0 0.0
  %1269 = vmatpush.msra.mxu0 0.0
  %1270 = vmatpush.msra.mxu0 %v1262
  %1271 = vmatpush.msra.mxu0 %v1233
  %1272 = vmatpush.msra.mxu0 %v1232
  %1273 = vmatpush.msra.mxu0 %v1231
  %1274 = vmatpush.msra.mxu0 %v1230
  %1275 = vmatpush.msra.mxu0 %v1229
  %1276 = vmatpush.msra.mxu0 %v1228
  %1277 = vmatpush.msra.mxu0 %v1227
  %1278 = vmatpush.msra.mxu0 %v1226
  %1279 = vmatpush.msra.mxu0 %v1225
  %1280 = vmatmul.f32.gmra.mxu0 %v1258
  %v1281 = vpop.f32.mrf.mxu0
  %v1282 = vadd.f32 0.0, %v1281
  %1283 = vdwg.mxu0
  %v1284 = vadd.f32 %v1224, %v1282
  %s1285 = scalar_lea.vmem %s5, 376
  %v1286 = vld [vmem:[%s1285] sm:$0xff]
  %v1287 = vld [vmem:[%s1285 + $0x8] sm:$0xff]
  %v1288 = vld [vmem:[%s1285 + $0x10] sm:$0xff]
  %v1289 = vld [vmem:[%s1285 + $0x18] sm:$0xff]
  %v1290 = vld [vmem:[%s1285 + $0x20] sm:$0xff]
  %v1291 = vld [vmem:[%s1285 + $0x28] sm:$0xff]
  %v1292 = vld [vmem:[%s1285 + $0x30] sm:$0xff]
  %v1293 = vld [vmem:[%s1285 + $0x38] sm:$0xff]
  %v1294 = vld [vmem:[%s1285 + $0x40] sm:$0xff]
  %v1295 = vld [vmem:[%s1285 + $0x48] sm:$0xff]
  %v1296 = vld [vmem:[%s1285 + $0x50] sm:$0xff]
  %v1297 = vld [vmem:[%s1285 + $0x58] sm:$0xff]
  %v1298 = vld [vmem:[%s1285 + $0x60] sm:$0xff]
  %v1299 = vld [vmem:[%s1285 + $0x68] sm:$0xff]
  %v1300 = vld [vmem:[%s1285 + $0x70] sm:$0xff]
  %v1301 = vld [vmem:[%s1285 + $0x78] sm:$0xff]
  %v1302 = vld [vmem:[%s1285 + $0x80] sm:$0xff]
  %v1303 = vld [vmem:[%s1285 + $0x88] sm:$0xff]
  %v1304 = vld [vmem:[%s1285 + $0x90] sm:$0xff]
  %v1305 = vld [vmem:[%s1285 + $0x98] sm:$0xff]
  %v1306 = vld [vmem:[%s1285 + $0xa0] sm:$0xff]
  %v1307 = vld [vmem:[%s1285 + $0xa8] sm:$0xff]
  %v1308 = vld [vmem:[%s1285 + $0xb0] sm:$0xff]
  %v1309 = vld [vmem:[%s1285 + $0xb8] sm:$0xff]
  %v1310 = vld [vmem:[%s1285 + $0xc0] sm:$0xff]
  %v1311 = vld [vmem:[%s1285 + $0xc8] sm:$0xff]
  %v1312 = vld [vmem:[%s1285 + $0xd0] sm:$0xff]
  %v1313 = vld [vmem:[%s1285 + $0xd8] sm:$0xff]
  %v1314 = vld [vmem:[%s1285 + $0xe0] sm:$0xff]
  %v1315 = vld [vmem:[%s1285 + $0xe8] sm:$0xff]
  %v1316 = vld [vmem:[%s1285 + $0xf0] sm:$0xff]
  %v1317 = vld [vmem:[%s1285 + $0xf8] sm:$0xff]
  %v1318 = vld [vmem:[%s1285 + $0x100] sm:$0xff]
  %v1319 = vld [vmem:[%s1285 + $0x108] sm:$0xff]
  %v1320 = vld [vmem:[%s1285 + $0x110] sm:$0xff]
  %v1321 = vld [vmem:[%s1285 + $0x118] sm:$0xff]
  %v1322 = vld [vmem:[%s1285 + $0x120] sm:$0xff]
  %v1323 = vld [vmem:[%s1285 + $0x128] sm:$0xff]
  %v1324 = vld [vmem:[%s1285 + $0x130] sm:$0xff]
  %v1325 = vld [vmem:[%s1285 + $0x138] sm:$0xff]
  %v1326 = vld [vmem:[%s1285 + $0x140] sm:$0xff]
  %v1327 = vld [vmem:[%s1285 + $0x148] sm:$0xff]
  %v1328 = vld [vmem:[%s1285 + $0x150] sm:$0xff]
  %v1329 = vld [vmem:[%s1285 + $0x158] sm:$0xff]
  %v1330 = vld [vmem:[%s1285 + $0x160] sm:$0xff]
  %v1331 = vld [vmem:[%s1285 + $0x168] sm:$0xff]
  %v1332 = vld [vmem:[%s1285 + $0x170] sm:$0xff]
  %v1333 = vrot.slane %v258, 1
  %v1334 = vsel %vm1111, %v327, %v1333
  %v1335 = vrot.slane %v396, 7
  %v1336 = vsel %vm1114, %v1335, %v1334
  %v1337 = vrot.slane %v465, 6
  %v1338 = vsel %vm1117, %v1337, %v1336
  %v1339 = vrot.slane %v534, 5
  %v1340 = vsel %vm1120, %v1339, %v1338
  %v1341 = vrot.slane %v603, 4
  %v1342 = vsel %vm1123, %v1341, %v1340
  %v1343 = vrot.slane %v672, 3
  %v1344 = vsel %vm1126, %v1343, %v1342
  %v1345 = vrot.slane %v741, 2
  %v1346 = vsel %vm1129, %v1345, %v1344
  %v1347 = vrot.slane %v278, 1
  %v1348 = vsel %vm1111, %v347, %v1347
  %v1349 = vrot.slane %v416, 7
  %v1350 = vsel %vm1114, %v1349, %v1348
  %v1351 = vrot.slane %v485, 6
  %v1352 = vsel %vm1117, %v1351, %v1350
  %v1353 = vrot.slane %v554, 5
  %v1354 = vsel %vm1120, %v1353, %v1352
  %v1355 = vrot.slane %v623, 4
  %v1356 = vsel %vm1123, %v1355, %v1354
  %v1357 = vrot.slane %v692, 3
  %v1358 = vsel %vm1126, %v1357, %v1356
  %v1359 = vrot.slane %v761, 2
  %v1360 = vsel %vm1129, %v1359, %v1358
  %v1361 = vrot.slane %v298, 1
  %v1362 = vsel %vm1111, %v367, %v1361
  %v1363 = vrot.slane %v436, 7
  %v1364 = vsel %vm1114, %v1363, %v1362
  %v1365 = vrot.slane %v505, 6
  %v1366 = vsel %vm1117, %v1365, %v1364
  %v1367 = vrot.slane %v574, 5
  %v1368 = vsel %vm1120, %v1367, %v1366
  %v1369 = vrot.slane %v643, 4
  %v1370 = vsel %vm1123, %v1369, %v1368
  %v1371 = vrot.slane %v712, 3
  %v1372 = vsel %vm1126, %v1371, %v1370
  %v1373 = vrot.slane %v781, 2
  %v1374 = vsel %vm1129, %v1373, %v1372
  %v1377 = vsel %vm1161, %v1374, 0
  %1379 = vmatpush.msra.mxu0 %v1301
  %1380 = vmatpush.msra.mxu0 %v1300
  %1381 = vmatpush.msra.mxu0 %v1299
  %1382 = vmatpush.msra.mxu0 %v1298
  %1383 = vmatpush.msra.mxu0 %v1297
  %1384 = vmatpush.msra.mxu0 %v1296
  %1385 = vmatpush.msra.mxu0 %v1295
  %1386 = vmatpush.msra.mxu0 %v1294
  %1387 = vmatpush.msra.mxu0 %v1293
  %1388 = vmatpush.msra.mxu0 %v1292
  %1389 = vmatpush.msra.mxu0 %v1291
  %1390 = vmatpush.msra.mxu0 %v1290
  %1391 = vmatpush.msra.mxu0 %v1289
  %1392 = vmatpush.msra.mxu0 %v1288
  %1393 = vmatpush.msra.mxu0 %v1287
  %1394 = vmatpush.msra.mxu0 %v1286
  %1395 = vmatmul.f32.gmra.mxu0 %v1346
  %v1396 = vpop.f32.mrf.mxu0
  %v1397 = vadd.f32 0.0, %v1396
  %1398 = vdwg.mxu0
  %1399 = vmatpush.msra.mxu0 %v1317
  %1400 = vmatpush.msra.mxu0 %v1316
  %1401 = vmatpush.msra.mxu0 %v1315
  %1402 = vmatpush.msra.mxu0 %v1314
  %1403 = vmatpush.msra.mxu0 %v1313
  %1404 = vmatpush.msra.mxu0 %v1312
  %1405 = vmatpush.msra.mxu0 %v1311
  %1406 = vmatpush.msra.mxu0 %v1310
  %1407 = vmatpush.msra.mxu0 %v1309
  %1408 = vmatpush.msra.mxu0 %v1308
  %1409 = vmatpush.msra.mxu0 %v1307
  %1410 = vmatpush.msra.mxu0 %v1306
  %1411 = vmatpush.msra.mxu0 %v1305
  %1412 = vmatpush.msra.mxu0 %v1304
  %1413 = vmatpush.msra.mxu0 %v1303
  %1414 = vmatpush.msra.mxu0 %v1302
  %1415 = vmatmul.f32.gmra.mxu0 %v1360
  %v1416 = vpop.f32.mrf.mxu0
  %v1417 = vadd.f32 %v1397, %v1416
  %1418 = vdwg.mxu0
  %1419 = vmatpush.msra.mxu0 0.0
  %1420 = vmatpush.msra.mxu0 %v1332
  %1421 = vmatpush.msra.mxu0 %v1331
  %1422 = vmatpush.msra.mxu0 %v1330
  %1423 = vmatpush.msra.mxu0 %v1329
  %1424 = vmatpush.msra.mxu0 %v1328
  %1425 = vmatpush.msra.mxu0 %v1327
  %1426 = vmatpush.msra.mxu0 %v1326
  %1427 = vmatpush.msra.mxu0 %v1325
  %1428 = vmatpush.msra.mxu0 %v1324
  %1429 = vmatpush.msra.mxu0 %v1323
  %1430 = vmatpush.msra.mxu0 %v1322
  %1431 = vmatpush.msra.mxu0 %v1321
  %1432 = vmatpush.msra.mxu0 %v1320
  %1433 = vmatpush.msra.mxu0 %v1319
  %1434 = vmatpush.msra.mxu0 %v1318
  %1435 = vmatmul.f32.gmra.mxu0 %v1377
  %v1436 = vpop.f32.mrf.mxu0
  %v1437 = vadd.f32 %v1417, %v1436
  %1438 = vdwg.mxu0
  %v1439 = vadd.f32 %v1284, %v1437
  %s1440 = scalar_lea.vmem %s6, 80
  %v1441 = vld [vmem:[%s1440] sm:$0xff]
  %v1442 = vld [vmem:[%s1440 + $0x8] sm:$0xff]
  %v1443 = vld [vmem:[%s1440 + $0x10] sm:$0xff]
  %v1444 = vld [vmem:[%s1440 + $0x18] sm:$0xff]
  %v1445 = vld [vmem:[%s1440 + $0x20] sm:$0xff]
  %v1446 = vld [vmem:[%s1440 + $0x28] sm:$0xff]
  %v1447 = vld [vmem:[%s1440 + $0x30] sm:$0xff]
  %v1448 = vld [vmem:[%s1440 + $0x38] sm:$0xff]
  %v1449 = vld [vmem:[%s1440 + $0x40] sm:$0xff]
  %v1450 = vld [vmem:[%s1440 + $0x48] sm:$0xf]
  %v1451 = vrot.slane %v872, 1
  %v1452 = vsel %vm1111, %v895, %v1451
  %v1453 = vrot.slane %v918, 7
  %v1454 = vsel %vm1114, %v1453, %v1452
  %v1455 = vrot.slane %v941, 6
  %v1456 = vsel %vm1117, %v1455, %v1454
  %v1457 = vrot.slane %v964, 5
  %v1458 = vsel %vm1120, %v1457, %v1456
  %v1459 = vrot.slane %v987, 4
  %v1460 = vsel %vm1123, %v1459, %v1458
  %v1461 = vrot.slane %v1010, 3
  %v1462 = vsel %vm1126, %v1461, %v1460
  %v1463 = vrot.slane %v1033, 2
  %v1464 = vsel %vm1129, %v1463, %v1462
  %v1465 = vsel %vm1257, %v1464, 0
  %v1468 = vsel %vm1260, %v1450, 0
  %1470 = vmatpush.msra.mxu0 0.0
  %1471 = vmatpush.msra.mxu0 0.0
  %1472 = vmatpush.msra.mxu0 0.0
  %1473 = vmatpush.msra.mxu0 0.0
  %1474 = vmatpush.msra.mxu0 0.0
  %1475 = vmatpush.msra.mxu0 0.0
  %1476 = vmatpush.msra.mxu0 %v1468
  %1477 = vmatpush.msra.mxu0 %v1449
  %1478 = vmatpush.msra.mxu0 %v1448
  %1479 = vmatpush.msra.mxu0 %v1447
  %1480 = vmatpush.msra.mxu0 %v1446
  %1481 = vmatpush.msra.mxu0 %v1445
  %1482 = vmatpush.msra.mxu0 %v1444
  %1483 = vmatpush.msra.mxu0 %v1443
  %1484 = vmatpush.msra.mxu0 %v1442
  %1485 = vmatpush.msra.mxu0 %v1441
  %1486 = vmatmul.f32.gmra.mxu0 %v1465
  %v1487 = vpop.f32.mrf.mxu0
  %v1488 = vadd.f32 0.0, %v1487
  %1489 = vdwg.mxu0
  %v1490 = vadd.f32 %v1439, %v1488
  %s1491 = scalar_lea.vmem %s5, 752
  %v1492 = vld [vmem:[%s1491] sm:$0xff]
  %v1493 = vld [vmem:[%s1491 + $0x8] sm:$0xff]
  %v1494 = vld [vmem:[%s1491 + $0x10] sm:$0xff]
  %v1495 = vld [vmem:[%s1491 + $0x18] sm:$0xff]
  %v1496 = vld [vmem:[%s1491 + $0x20] sm:$0xff]
  %v1497 = vld [vmem:[%s1491 + $0x28] sm:$0xff]
  %v1498 = vld [vmem:[%s1491 + $0x30] sm:$0xff]
  %v1499 = vld [vmem:[%s1491 + $0x38] sm:$0xff]
  %v1500 = vld [vmem:[%s1491 + $0x40] sm:$0xff]
  %v1501 = vld [vmem:[%s1491 + $0x48] sm:$0xff]
  %v1502 = vld [vmem:[%s1491 + $0x50] sm:$0xff]
  %v1503 = vld [vmem:[%s1491 + $0x58] sm:$0xff]
  %v1504 = vld [vmem:[%s1491 + $0x60] sm:$0xff]
  %v1505 = vld [vmem:[%s1491 + $0x68] sm:$0xff]
  %v1506 = vld [vmem:[%s1491 + $0x70] sm:$0xff]
  %v1507 = vld [vmem:[%s1491 + $0x78] sm:$0xff]
  %v1508 = vld [vmem:[%s1491 + $0x80] sm:$0xff]
  %v1509 = vld [vmem:[%s1491 + $0x88] sm:$0xff]
  %v1510 = vld [vmem:[%s1491 + $0x90] sm:$0xff]
  %v1511 = vld [vmem:[%s1491 + $0x98] sm:$0xff]
  %v1512 = vld [vmem:[%s1491 + $0xa0] sm:$0xff]
  %v1513 = vld [vmem:[%s1491 + $0xa8] sm:$0xff]
  %v1514 = vld [vmem:[%s1491 + $0xb0] sm:$0xff]
  %v1515 = vld [vmem:[%s1491 + $0xb8] sm:$0xff]
  %v1516 = vld [vmem:[%s1491 + $0xc0] sm:$0xff]
  %v1517 = vld [vmem:[%s1491 + $0xc8] sm:$0xff]
  %v1518 = vld [vmem:[%s1491 + $0xd0] sm:$0xff]
  %v1519 = vld [vmem:[%s1491 + $0xd8] sm:$0xff]
  %v1520 = vld [vmem:[%s1491 + $0xe0] sm:$0xff]
  %v1521 = vld [vmem:[%s1491 + $0xe8] sm:$0xff]
  %v1522 = vld [vmem:[%s1491 + $0xf0] sm:$0xff]
  %v1523 = vld [vmem:[%s1491 + $0xf8] sm:$0xff]
  %v1524 = vld [vmem:[%s1491 + $0x100] sm:$0xff]
  %v1525 = vld [vmem:[%s1491 + $0x108] sm:$0xff]
  %v1526 = vld [vmem:[%s1491 + $0x110] sm:$0xff]
  %v1527 = vld [vmem:[%s1491 + $0x118] sm:$0xff]
  %v1528 = vld [vmem:[%s1491 + $0x120] sm:$0xff]
  %v1529 = vld [vmem:[%s1491 + $0x128] sm:$0xff]
  %v1530 = vld [vmem:[%s1491 + $0x130] sm:$0xff]
  %v1531 = vld [vmem:[%s1491 + $0x138] sm:$0xff]
  %v1532 = vld [vmem:[%s1491 + $0x140] sm:$0xff]
  %v1533 = vld [vmem:[%s1491 + $0x148] sm:$0xff]
  %v1534 = vld [vmem:[%s1491 + $0x150] sm:$0xff]
  %v1535 = vld [vmem:[%s1491 + $0x158] sm:$0xff]
  %v1536 = vld [vmem:[%s1491 + $0x160] sm:$0xff]
  %v1537 = vld [vmem:[%s1491 + $0x168] sm:$0xff]
  %v1538 = vld [vmem:[%s1491 + $0x170] sm:$0xff]
  %v1539 = vrot.slane %v258, 2
  %v1540 = vrot.slane %v327, 1
  %v1541 = vsel %vm1111, %v1540, %v1539
  %v1542 = vsel %vm1114, %v396, %v1541
  %v1543 = vrot.slane %v465, 7
  %v1544 = vsel %vm1117, %v1543, %v1542
  %v1545 = vrot.slane %v534, 6
  %v1546 = vsel %vm1120, %v1545, %v1544
  %v1547 = vrot.slane %v603, 5
  %v1548 = vsel %vm1123, %v1547, %v1546
  %v1549 = vrot.slane %v672, 4
  %v1550 = vsel %vm1126, %v1549, %v1548
  %v1551 = vrot.slane %v741, 3
  %v1552 = vsel %vm1129, %v1551, %v1550
  %v1553 = vrot.slane %v278, 2
  %v1554 = vrot.slane %v347, 1
  %v1555 = vsel %vm1111, %v1554, %v1553
  %v1556 = vsel %vm1114, %v416, %v1555
  %v1557 = vrot.slane %v485, 7
  %v1558 = vsel %vm1117, %v1557, %v1556
  %v1559 = vrot.slane %v554, 6
  %v1560 = vsel %vm1120, %v1559, %v1558
  %v1561 = vrot.slane %v623, 5
  %v1562 = vsel %vm1123, %v1561, %v1560
  %v1563 = vrot.slane %v692, 4
  %v1564 = vsel %vm1126, %v1563, %v1562
  %v1565 = vrot.slane %v761, 3
  %v1566 = vsel %vm1129, %v1565, %v1564
  %v1567 = vrot.slane %v298, 2
  %v1568 = vrot.slane %v367, 1
  %v1569 = vsel %vm1111, %v1568, %v1567
  %v1570 = vsel %vm1114, %v436, %v1569
  %v1571 = vrot.slane %v505, 7
  %v1572 = vsel %vm1117, %v1571, %v1570
  %v1573 = vrot.slane %v574, 6
  %v1574 = vsel %vm1120, %v1573, %v1572
  %v1575 = vrot.slane %v643, 5
  %v1576 = vsel %vm1123, %v1575, %v1574
  %v1577 = vrot.slane %v712, 4
  %v1578 = vsel %vm1126, %v1577, %v1576
  %v1579 = vrot.slane %v781, 3
  %v1580 = vsel %vm1129, %v1579, %v1578
  %v1583 = vsel %vm1161, %v1580, 0
  %1585 = vmatpush.msra.mxu0 %v1507
  %1586 = vmatpush.msra.mxu0 %v1506
  %1587 = vmatpush.msra.mxu0 %v1505
  %1588 = vmatpush.msra.mxu0 %v1504
  %1589 = vmatpush.msra.mxu0 %v1503
  %1590 = vmatpush.msra.mxu0 %v1502
  %1591 = vmatpush.msra.mxu0 %v1501
  %1592 = vmatpush.msra.mxu0 %v1500
  %1593 = vmatpush.msra.mxu0 %v1499
  %1594 = vmatpush.msra.mxu0 %v1498
  %1595 = vmatpush.msra.mxu0 %v1497
  %1596 = vmatpush.msra.mxu0 %v1496
  %1597 = vmatpush.msra.mxu0 %v1495
  %1598 = vmatpush.msra.mxu0 %v1494
  %1599 = vmatpush.msra.mxu0 %v1493
  %1600 = vmatpush.msra.mxu0 %v1492
  %1601 = vmatmul.f32.gmra.mxu0 %v1552
  %v1602 = vpop.f32.mrf.mxu0
  %v1603 = vadd.f32 0.0, %v1602
  %1604 = vdwg.mxu0
  %1605 = vmatpush.msra.mxu0 %v1523
  %1606 = vmatpush.msra.mxu0 %v1522
  %1607 = vmatpush.msra.mxu0 %v1521
  %1608 = vmatpush.msra.mxu0 %v1520
  %1609 = vmatpush.msra.mxu0 %v1519
  %1610 = vmatpush.msra.mxu0 %v1518
  %1611 = vmatpush.msra.mxu0 %v1517
  %1612 = vmatpush.msra.mxu0 %v1516
  %1613 = vmatpush.msra.mxu0 %v1515
  %1614 = vmatpush.msra.mxu0 %v1514
  %1615 = vmatpush.msra.mxu0 %v1513
  %1616 = vmatpush.msra.mxu0 %v1512
  %1617 = vmatpush.msra.mxu0 %v1511
  %1618 = vmatpush.msra.mxu0 %v1510
  %1619 = vmatpush.msra.mxu0 %v1509
  %1620 = vmatpush.msra.mxu0 %v1508
  %1621 = vmatmul.f32.gmra.mxu0 %v1566
  %v1622 = vpop.f32.mrf.mxu0
  %v1623 = vadd.f32 %v1603, %v1622
  %1624 = vdwg.mxu0
  %1625 = vmatpush.msra.mxu0 0.0
  %1626 = vmatpush.msra.mxu0 %v1538
  %1627 = vmatpush.msra.mxu0 %v1537
  %1628 = vmatpush.msra.mxu0 %v1536
  %1629 = vmatpush.msra.mxu0 %v1535
  %1630 = vmatpush.msra.mxu0 %v1534
  %1631 = vmatpush.msra.mxu0 %v1533
  %1632 = vmatpush.msra.mxu0 %v1532
  %1633 = vmatpush.msra.mxu0 %v1531
  %1634 = vmatpush.msra.mxu0 %v1530
  %1635 = vmatpush.msra.mxu0 %v1529
  %1636 = vmatpush.msra.mxu0 %v1528
  %1637 = vmatpush.msra.mxu0 %v1527
  %1638 = vmatpush.msra.mxu0 %v1526
  %1639 = vmatpush.msra.mxu0 %v1525
  %1640 = vmatpush.msra.mxu0 %v1524
  %1641 = vmatmul.f32.gmra.mxu0 %v1583
  %v1642 = vpop.f32.mrf.mxu0
  %v1643 = vadd.f32 %v1623, %v1642
  %1644 = vdwg.mxu0
  %v1645 = vadd.f32 %v1490, %v1643
  %s1646 = scalar_lea.vmem %s6, 160
  %v1647 = vld [vmem:[%s1646] sm:$0xff]
  %v1648 = vld [vmem:[%s1646 + $0x8] sm:$0xff]
  %v1649 = vld [vmem:[%s1646 + $0x10] sm:$0xff]
  %v1650 = vld [vmem:[%s1646 + $0x18] sm:$0xff]
  %v1651 = vld [vmem:[%s1646 + $0x20] sm:$0xff]
  %v1652 = vld [vmem:[%s1646 + $0x28] sm:$0xff]
  %v1653 = vld [vmem:[%s1646 + $0x30] sm:$0xff]
  %v1654 = vld [vmem:[%s1646 + $0x38] sm:$0xff]
  %v1655 = vld [vmem:[%s1646 + $0x40] sm:$0xff]
  %v1656 = vld [vmem:[%s1646 + $0x48] sm:$0xf]
  %v1657 = vrot.slane %v872, 2
  %v1658 = vrot.slane %v895, 1
  %v1659 = vsel %vm1111, %v1658, %v1657
  %v1660 = vsel %vm1114, %v918, %v1659
  %v1661 = vrot.slane %v941, 7
  %v1662 = vsel %vm1117, %v1661, %v1660
  %v1663 = vrot.slane %v964, 6
  %v1664 = vsel %vm1120, %v1663, %v1662
  %v1665 = vrot.slane %v987, 5
  %v1666 = vsel %vm1123, %v1665, %v1664
  %v1667 = vrot.slane %v1010, 4
  %v1668 = vsel %vm1126, %v1667, %v1666
  %v1669 = vrot.slane %v1033, 3
  %v1670 = vsel %vm1129, %v1669, %v1668
  %v1671 = vsel %vm1257, %v1670, 0
  %v1674 = vsel %vm1260, %v1656, 0
  %1676 = vmatpush.msra.mxu0 0.0
  %1677 = vmatpush.msra.mxu0 0.0
  %1678 = vmatpush.msra.mxu0 0.0
  %1679 = vmatpush.msra.mxu0 0.0
  %1680 = vmatpush.msra.mxu0 0.0
  %1681 = vmatpush.msra.mxu0 0.0
  %1682 = vmatpush.msra.mxu0 %v1674
  %1683 = vmatpush.msra.mxu0 %v1655
  %1684 = vmatpush.msra.mxu0 %v1654
  %1685 = vmatpush.msra.mxu0 %v1653
  %1686 = vmatpush.msra.mxu0 %v1652
  %1687 = vmatpush.msra.mxu0 %v1651
  %1688 = vmatpush.msra.mxu0 %v1650
  %1689 = vmatpush.msra.mxu0 %v1649
  %1690 = vmatpush.msra.mxu0 %v1648
  %1691 = vmatpush.msra.mxu0 %v1647
  %1692 = vmatmul.f32.gmra.mxu0 %v1671
  %v1693 = vpop.f32.mrf.mxu0
  %v1694 = vadd.f32 0.0, %v1693
  %1695 = vdwg.mxu0
  %v1696 = vadd.f32 %v1645, %v1694
  %v1697 = vmax.f32 %v1696, 0.0
  %v1698 = vld [vmem:[%s8] sm:$0xff]
  %v1699 = vld [vmem:[%s8 + $0x8] sm:$0xff]
  %v1700 = vld [vmem:[%s8 + $0x10] sm:$0xff]
  %v1701 = vld [vmem:[%s8 + $0x18] sm:$0xff]
  %v1702 = vld [vmem:[%s8 + $0x20] sm:$0xff]
  %v1703 = vld [vmem:[%s8 + $0x28] sm:$0xff]
  %v1704 = vld [vmem:[%s8 + $0x30] sm:$0xff]
  %v1705 = vld [vmem:[%s8 + $0x38] sm:$0xff]
  %s1706 = sld [smem:[#allocation2]]
  %v1707 = vstv %s1706
  %vm1708 = vcmask 523264
  %v1710 = vsel %vm1708, %v1697, 0
  %1712 = vmatpush.msra.mxu0 0.0
  %1713 = vmatpush.msra.mxu0 0.0
  %1714 = vmatpush.msra.mxu0 0.0
  %1715 = vmatpush.msra.mxu0 0.0
  %1716 = vmatpush.msra.mxu0 0.0
  %1717 = vmatpush.msra.mxu0 0.0
  %1718 = vmatpush.msra.mxu0 0.0
  %1719 = vmatpush.msra.mxu0 0.0
  %1720 = vmatpush.msra.mxu0 %v1705
  %1721 = vmatpush.msra.mxu0 %v1704
  %1722 = vmatpush.msra.mxu0 %v1703
  %1723 = vmatpush.msra.mxu0 %v1702
  %1724 = vmatpush.msra.mxu0 %v1701
  %1725 = vmatpush.msra.mxu0 %v1700
  %1726 = vmatpush.msra.mxu0 %v1699
  %1727 = vmatpush.msra.mxu0 %v1698
  %1728 = vmatmul.f32.gmra.mxu0 %v1710
  %v1729 = vpop.f32.mrf.mxu0
  %v1730 = vadd.f32 %v1707, %v1729
  %1731 = vdwg.mxu0
  %v1732 = vxor.u32 %v1730, 2147483648
  %v1733 = vmul.f32 %v1732, 1.442695
  %v1734 = vpow.pop %v1733
  %v1735 = vadd.f32 %v1734, 1.0
  %v1736 = vrcp.pop %v1735
  %v1737 = vmul.f32 %v1735, %v1736
  %v1738 = vsub.f32 1.0, %v1737
  %v1739 = vmul.f32 %v1736, %v1738
  %v1740 = vadd.f32 %v1736, %v1739
  %vm1741 = vweird.f32 %v1735
  %vm1742 = vweird.f32 %v1736
  %vm1743 = vmor %vm1741, %vm1742
  %v1744 = vsel %vm1743, %v1736, %v1740
  %v1745 = vand.u32 2147483647, %v1735
  %vm1746 = vcmp.eq.f32.partialorder %v1745, 8.507059e+37
  %v1747 = vand.u32 %v1735, 2147483648
  %v1748 = vor.u32 1.1754944e-38, %v1747
  %v1749 = vsel %vm1746, %v1748, %v1744
  %v1750 = vmul.f32 1.0, %v1749
  %vm1751 = vcmask 7168
  %1752 = vst.msk [vmem:[%s9] sm:$0xff] %vm1751, %v1750
  // Predicated region
  $region38: #{tpu_custom_call.1} parent=0 // pred_check
    _
  $region39: #{tpu_custom_call.1} parent=0 // pred_check_branch
    %1754 = sbr.rel (0) target = $region41
  $region40: #{tpu_custom_call.1} parent=0 // pred_region
    _
  $region41: #{tpu_custom_call.1} parent=0 // pred_fallthru
    _
  // Predicated region
  $region42: #{tpu_custom_call.1} parent=0 // pred_check
    _
  $region43: #{tpu_custom_call.1} parent=0 // pred_check_branch
    %1756 = sbr.rel (0) target = $region45
  $region44: #{tpu_custom_call.1} parent=0 // pred_region
    _
  $region45: #{tpu_custom_call.1} parent=0 // pred_fallthru
    _

</llo_original>
